<compile_context>
chip_gen: v5e
topology: v5e:2x2
jax: 0.10.0
libtpu: 0.0.40
codegen_flags: <defaults>
</compile_context>

<pallas_src>
import functools

import jax
import jax.numpy as jnp
from jax.experimental import pallas as pl
from jax.experimental.pallas import tpu as pltpu

EPS = 1e-12
MAX_REGION_LEN = 36
MAX_SEQ_LEN = 36
CLS_ID = 45
SEQ_TOTAL = MAX_REGION_LEN + 1 + MAX_SEQ_LEN  # 73


def _bert_embeddings_kernel(ids_ref, feat_ref, loc_ref, posm_ref,
                            tab_ref, w_img_ref, w_loc_ref, small_ref,
                            out_ref, *, vocab_size):
    M, H = out_ref.shape                       # M = b_tile * 73
    VT = tab_ref.shape[0]                      # word vocab + type vocab
    inv_h = 1.0 / H

    small = small_ref[...]                     # (10, H)
    b_img, b_loc = small[0:1], small[1:2]
    g_feat, be_feat = small[2:3], small[3:4]
    g_loc, be_loc = small[4:5], small[5:6]
    g_img, be_img = small[6:7], small[7:8]
    g_ln, be_ln = small[8:9], small[9:10]

    def layernorm(x, g, b):
        # var = E[x^2] - E[x]^2: two independent reductions (can overlap on the
        # XLU), one fewer full VPU pass; clamp >= 0 against cancellation.
        mean = jnp.sum(x, axis=-1, keepdims=True) * inv_h
        mean_sq = jnp.sum(x * x, axis=-1, keepdims=True) * inv_h
        var = jnp.maximum(mean_sq - mean * mean, 0.0)
        return (x - mean) * jax.lax.rsqrt(var + EPS) * g + b

    # --- text branch: word + token-type embedding via ONE fused one-hot matmul
    #     against the concatenated table. bf16 one-hot is exact (0/1); table is
    #     bf16 (native MXU input width) -> tiny rounding on embedding values.
    word_ids = ids_ref[:, 0:1]                                   # (M, 1) int32
    tok_cols = ids_ref[:, 1:2] + vocab_size                      # (M, 1) int32
    col = jax.lax.broadcasted_iota(jnp.int32, (M, VT), 1)
    onehot = jnp.logical_or(col == word_ids, col == tok_cols).astype(jnp.bfloat16)
    # NOTE: out-of-range ids contribute zero (torch nn.Embedding would raise).
    txt_e = jnp.dot(onehot, tab_ref[...], preferred_element_type=jnp.float32)
    emb = txt_e + posm_ref[:, 0:H]                               # + position emb

    # --- image branch over the padded 73-row layout; masked below.
    img_e = jnp.dot(feat_ref[...], w_img_ref[...],
                    preferred_element_type=jnp.float32) + b_img
    loc_e = jnp.dot(loc_ref[...], w_loc_ref[...],
                    preferred_element_type=jnp.float32) + b_loc
    img_e = layernorm(img_e, g_feat, be_feat)
    loc_e = layernorm(loc_e, g_loc, be_loc)
    v = layernorm(img_e + loc_e, g_img, be_img)

    # rows 1..36 of each 73-row sequence get the image term (matches torch
    # `embeddings[:, 1:37] += img_embeddings`; row 0 / CLS gets none).  The 0/1
    # mask is packed as column H of posm -> no in-kernel iota/rem.
    img_mask = posm_ref[:, H:H + 1]                              # (M, 1) f32
    fused = emb + img_mask * v
    out_ref[...] = layernorm(fused, g_ln, be_ln)                 # one aligned full-block store


def _pick_b_tile(batch, max_tile=16):
    """Batch rows per grid step.

    One big step when the whole batch fits (per-step overhead ~0.35us dominates
    tiny steps; only v7x has 2 TensorCores and even there tiny steps lose).
    For larger batches pick a multiple of 8 dividing the batch so the
    (b_tile*73, K) second-to-last block dim stays 8-aligned.  max_tile=16 keeps
    the double-buffered, lane-padded (last dim < 128 pads to 128 lanes in VMEM)
    blocks comfortably under the 16 MiB v5e scoped-VMEM default.
    """
    if batch <= max_tile:
        return batch
    for cand in range(max_tile, 7, -1):
        if cand % 8 == 0 and batch % cand == 0:
            return cand
    return batch  # awkward batch: single big step (always correct)


def init_params(key, vocab_size=64, hidden_size=32, max_position_embeddings=40,
                type_vocab_size=2, v_feature_size=16):
    ks = jax.random.split(key, 5)
    word = jax.random.normal(ks[0], (vocab_size, hidden_size), jnp.float32) * 0.02
    word = word.at[0].set(0.0)  # nn.Embedding(padding_idx=0)
    pos = jax.random.normal(ks[1], (max_position_embeddings, hidden_size), jnp.float32) * 0.02
    tok = jax.random.normal(ks[2], (type_vocab_size, hidden_size), jnp.float32) * 0.02
    # Linear weights stored as (in, out) so the kernel does x @ W (same math as torch x @ W.T).
    w_img = jax.random.normal(ks[3], (v_feature_size, hidden_size), jnp.float32) * 0.02
    w_loc = jax.random.normal(ks[4], (5, hidden_size), jnp.float32) * 0.02
    ones = jnp.ones((1, hidden_size), jnp.float32)
    zeros = jnp.zeros((1, hidden_size), jnp.float32)
    return dict(word_emb=word, pos_emb=pos, tok_emb=tok,
                w_img=w_img, b_img=zeros, w_loc=w_loc, b_loc=zeros,
                g_feat=ones, be_feat=zeros, g_loc=ones, be_loc=zeros,
                g_img=ones, be_img=zeros, g_ln=ones, be_ln=zeros)


def bert_embeddings_forward(params, img_ids, img_loc, input_ids, token_type_ids):
    B = input_ids.shape[0]
    V, H = params["word_emb"].shape
    S = SEQ_TOTAL
    F = img_ids.shape[-1]

    # ---- glue: id preprocessing (mirrors the torch forward exactly) ----
    input_ids = input_ids.astype(jnp.int32).at[:, 0].add(1)
    input_ids_v = jnp.full((B, MAX_REGION_LEN + 1), 48, jnp.int32).at[:, 0].set(CLS_ID)
    full_input_ids = jnp.concatenate([input_ids_v, input_ids], axis=-1)          # (B, 73)

    token_type_ids = token_type_ids.astype(jnp.int32) + 1
    token_type_ids_v = jnp.zeros((B, MAX_REGION_LEN + 1), jnp.int32)
    full_token_type_ids = jnp.concatenate([token_type_ids_v, token_type_ids], -1)

    ids2d = jnp.stack([full_input_ids, full_token_type_ids], axis=-1).reshape(B * S, 2)

    # position ids are compile-time constant -> gather the rows here; pack the
    # image-row mask as an extra column and pre-tile over the batch so the
    # kernel gets a ready-to-add (B*73, H+1) slab (batch folded into M).
    pos_ids = jnp.concatenate([jnp.zeros((1,), jnp.int32),
                               jnp.ones((MAX_REGION_LEN,), jnp.int32),
                               jnp.arange(MAX_SEQ_LEN, dtype=jnp.int32) + 2])    # (73,)
    pos_emb = params["pos_emb"][pos_ids]                                         # (73, H)
    row = jnp.arange(S)
    mask_col = ((row >= 1) & (row < 1 + MAX_REGION_LEN)).astype(jnp.float32)[:, None]
    posm = jnp.tile(jnp.concatenate([pos_emb, mask_col], axis=-1), (B, 1))       # (B*73, H+1)

    # image features / locations padded into the 73-row layout (rows 1..36),
    # flattened so the batch folds into the matmul M dimension.
    feat = jnp.zeros((B, S, F), jnp.float32).at[:, 1:1 + MAX_REGION_LEN].set(
        img_ids[:, 1:].astype(jnp.float32)).reshape(B * S, F)
    loc = jnp.zeros((B, S, 5), jnp.float32).at[:, 1:1 + MAX_REGION_LEN].set(
        img_loc[:, 1:].astype(jnp.float32)).reshape(B * S, 5)

    # fused word + token-type table; bf16 = native MXU input width (flag:
    # <=~0.4% rounding on embedding values -- keep f32 for bit-exactness).
    table = jnp.concatenate([params["word_emb"], params["tok_emb"]],
                            axis=0).astype(jnp.bfloat16)                         # (V+Vt, H)

    # pack the 10 tiny per-channel vectors into one (10, H) array -> one DMA.
    small = jnp.concatenate([params["b_img"], params["b_loc"],
                             params["g_feat"], params["be_feat"],
                             params["g_loc"], params["be_loc"],
                             params["g_img"], params["be_img"],
                             params["g_ln"], params["be_ln"]], axis=0)           # (10, H)

    # NOTE: the torch "repeat if batch mismatch" branch is not taken (same batch).

    b_tile = _pick_b_tile(B)
    grid = (B // b_tile,)
    mt = b_tile * S

    per_batch = lambda k: pl.BlockSpec((mt, k), lambda g: (g, 0))
    shared = lambda shape: pl.BlockSpec(shape, lambda g: (0, 0))

    kernel = functools.partial(_bert_embeddings_kernel, vocab_size=V)

    out2d = pl.pallas_call(
        kernel,
        out_shape=jax.ShapeDtypeStruct((B * S, H), jnp.float32),
        grid=grid,
        in_specs=[per_batch(2),                 # packed (word, token-type) ids
                  per_batch(F),                 # padded image features
                  per_batch(5),                 # padded image locations
                  per_batch(H + 1),             # position emb + image-row mask
                  shared(table.shape),          # fused word+type table (bf16)
                  shared(params["w_img"].shape),
                  shared(params["w_loc"].shape),
                  shared(small.shape)],         # packed biases + LN gamma/beta
        out_specs=per_batch(H),
        compiler_params=pltpu.CompilerParams(
            dimension_semantics=("parallel",) if grid[0] > 1 else ("arbitrary",)),
    )(ids2d, feat, loc, posm, table, params["w_img"], params["w_loc"], small)

    return out2d.reshape(B, S, H)


if __name__ == "__main__":
    key = jax.random.PRNGKey(0)
    pk, k1, k2, k3 = jax.random.split(key, 4)

    HIDDEN = 32
    V_FEAT = 16
    B = 2

    params = init_params(pk, vocab_size=64, hidden_size=HIDDEN,
                         max_position_embeddings=40, type_vocab_size=2,
                         v_feature_size=V_FEAT)

    input_ids = jax.random.randint(k1, (B, MAX_SEQ_LEN), 1, 40, jnp.int32)
    token_type_ids = jnp.zeros((B, MAX_SEQ_LEN), jnp.int32)
    img_ids = jax.random.normal(k2, (B, MAX_REGION_LEN + 1, V_FEAT), jnp.float32)
    img_loc = jax.random.uniform(k3, (B, MAX_REGION_LEN + 1, 5), jnp.float32)

    out = bert_embeddings_forward(params, img_ids, img_loc, input_ids, token_type_ids)
    jax.block_until_ready(out)
    assert out.shape == (B, SEQ_TOTAL, HIDDEN) and out.dtype == jnp.float32
    assert bool(jnp.all(jnp.isfinite(out)))
    print("KERNEL_OK")
</pallas_src>

<mosaic_0001>
module attributes {stable_mosaic.version = 11 : i64} {
  func.func @_bert_embeddings_kernel(%arg0: i32, %arg1: memref<146x2xi32, #tpu.memory_space<vmem>>, %arg2: memref<146x16xf32, #tpu.memory_space<vmem>>, %arg3: memref<146x5xf32, #tpu.memory_space<vmem>>, %arg4: memref<146x33xf32, #tpu.memory_space<vmem>>, %arg5: memref<66x32xbf16, #tpu.memory_space<vmem>>, %arg6: memref<16x32xf32, #tpu.memory_space<vmem>>, %arg7: memref<5x32xf32, #tpu.memory_space<vmem>>, %arg8: memref<10x32xf32, #tpu.memory_space<vmem>>, %arg9: memref<146x32xf32, #tpu.memory_space<vmem>>) attributes {dimension_semantics = [#tpu.dimension_semantics<arbitrary>], iteration_bounds = array<i64: 1>, scalar_prefetch = 0 : i64, scratch_operands = 0 : i64, tpu.core_type = #tpu.core_type<tc>, window_params = [{transform_indices = @transform_0, window_bounds = array<i64: 146, 2>}, {transform_indices = @transform_1, window_bounds = array<i64: 146, 16>}, {transform_indices = @transform_2, window_bounds = array<i64: 146, 5>}, {transform_indices = @transform_3, window_bounds = array<i64: 146, 33>}, {pipeline_mode = #tpu.pipeline_mode<synchronous>, transform_indices = @transform_4, window_bounds = array<i64: 66, 32>}, {pipeline_mode = #tpu.pipeline_mode<synchronous>, transform_indices = @transform_5, window_bounds = array<i64: 16, 32>}, {pipeline_mode = #tpu.pipeline_mode<synchronous>, transform_indices = @transform_6, window_bounds = array<i64: 5, 32>}, {pipeline_mode = #tpu.pipeline_mode<synchronous>, transform_indices = @transform_7, window_bounds = array<i64: 10, 32>}, {transform_indices = @transform_8, window_bounds = array<i64: 146, 32>}]} {
    %c0 = arith.constant 0 : index
    %c0_0 = arith.constant 0 : index
    %0 = vector.load %arg8[%c0, %c0_0] : memref<10x32xf32, #tpu.memory_space<vmem>>, vector<10x32xf32>
    %1 = vector.extract_strided_slice %0 {offsets = [0, 0], sizes = [1, 32], strides = [1, 1]} : vector<10x32xf32> to vector<1x32xf32>
    %2 = vector.extract_strided_slice %0 {offsets = [1, 0], sizes = [1, 32], strides = [1, 1]} : vector<10x32xf32> to vector<1x32xf32>
    %3 = vector.extract_strided_slice %0 {offsets = [2, 0], sizes = [1, 32], strides = [1, 1]} : vector<10x32xf32> to vector<1x32xf32>
    %4 = vector.extract_strided_slice %0 {offsets = [3, 0], sizes = [1, 32], strides = [1, 1]} : vector<10x32xf32> to vector<1x32xf32>
    %5 = vector.extract_strided_slice %0 {offsets = [4, 0], sizes = [1, 32], strides = [1, 1]} : vector<10x32xf32> to vector<1x32xf32>
    %6 = vector.extract_strided_slice %0 {offsets = [5, 0], sizes = [1, 32], strides = [1, 1]} : vector<10x32xf32> to vector<1x32xf32>
    %7 = vector.extract_strided_slice %0 {offsets = [6, 0], sizes = [1, 32], strides = [1, 1]} : vector<10x32xf32> to vector<1x32xf32>
    %8 = vector.extract_strided_slice %0 {offsets = [7, 0], sizes = [1, 32], strides = [1, 1]} : vector<10x32xf32> to vector<1x32xf32>
    %9 = vector.extract_strided_slice %0 {offsets = [8, 0], sizes = [1, 32], strides = [1, 1]} : vector<10x32xf32> to vector<1x32xf32>
    %10 = vector.extract_strided_slice %0 {offsets = [9, 0], sizes = [1, 32], strides = [1, 1]} : vector<10x32xf32> to vector<1x32xf32>
    %c0_1 = arith.constant 0 : index
    %c0_2 = arith.constant 0 : index
    %11 = vector.load %arg1[%c0_1, %c0_2] : memref<146x2xi32, #tpu.memory_space<vmem>>, vector<146x1xi32>
    %c0_3 = arith.constant 0 : index
    %c1 = arith.constant 1 : index
    %12 = vector.load %arg1[%c0_3, %c1] : memref<146x2xi32, #tpu.memory_space<vmem>>, vector<146x1xi32>
    %c64_i32 = arith.constant 64 : i32
    %13 = vector.broadcast %c64_i32 : i32 to vector<146x1xi32>
    %14 = arith.addi %12, %13 : vector<146x1xi32>
    %15 = tpu.iota {dimensions = array<i32: 1>} : vector<146x66xi32>
    %16 = vector.broadcast %11 : vector<146x1xi32> to vector<146x66xi32>
    %17 = arith.cmpi eq, %15, %16 : vector<146x66xi32>
    %18 = vector.broadcast %14 : vector<146x1xi32> to vector<146x66xi32>
    %19 = arith.cmpi eq, %15, %18 : vector<146x66xi32>
    %20 = arith.ori %17, %19 : vector<146x66xi1>
    %21 = arith.extui %20 : vector<146x66xi1> to vector<146x66xi32>
    %22 = arith.sitofp %21 : vector<146x66xi32> to vector<146x66xf32>
    %23 = arith.truncf %22 : vector<146x66xf32> to vector<146x66xbf16>
    %c0_4 = arith.constant 0 : index
    %c0_5 = arith.constant 0 : index
    %24 = vector.load %arg5[%c0_4, %c0_5] : memref<66x32xbf16, #tpu.memory_space<vmem>>, vector<66x32xbf16>
    %cst = arith.constant dense<0.000000e+00> : vector<146x32xf32>
    %25 = tpu.matmul %23, %24, %cst {dimension_numbers = #tpu.dot_dimension_numbers<[1], [0], [0], [1], [0, 0, 1, 1], [], []>} : vector<146x66xbf16>, vector<66x32xbf16>, vector<146x32xf32> -> vector<146x32xf32>
    %c0_6 = arith.constant 0 : index
    %c0_7 = arith.constant 0 : index
    %26 = vector.load %arg4[%c0_6, %c0_7] : memref<146x33xf32, #tpu.memory_space<vmem>>, vector<146x32xf32>
    %27 = arith.addf %25, %26 : vector<146x32xf32>
    %c0_8 = arith.constant 0 : index
    %c0_9 = arith.constant 0 : index
    %28 = vector.load %arg2[%c0_8, %c0_9] : memref<146x16xf32, #tpu.memory_space<vmem>>, vector<146x16xf32>
    %c0_10 = arith.constant 0 : index
    %c0_11 = arith.constant 0 : index
    %29 = vector.load %arg6[%c0_10, %c0_11] : memref<16x32xf32, #tpu.memory_space<vmem>>, vector<16x32xf32>
    %cst_12 = arith.constant dense<0.000000e+00> : vector<146x32xf32>
    %30 = tpu.matmul %28, %29, %cst_12 {dimension_numbers = #tpu.dot_dimension_numbers<[1], [0], [0], [1], [0, 0, 1, 1], [], []>} : vector<146x16xf32>, vector<16x32xf32>, vector<146x32xf32> -> vector<146x32xf32>
    %31 = vector.broadcast %1 : vector<1x32xf32> to vector<146x32xf32>
    %32 = arith.addf %30, %31 : vector<146x32xf32>
    %c0_13 = arith.constant 0 : index
    %c0_14 = arith.constant 0 : index
    %33 = vector.load %arg3[%c0_13, %c0_14] : memref<146x5xf32, #tpu.memory_space<vmem>>, vector<146x5xf32>
    %c0_15 = arith.constant 0 : index
    %c0_16 = arith.constant 0 : index
    %34 = vector.load %arg7[%c0_15, %c0_16] : memref<5x32xf32, #tpu.memory_space<vmem>>, vector<5x32xf32>
    %cst_17 = arith.constant dense<0.000000e+00> : vector<146x32xf32>
    %35 = tpu.matmul %33, %34, %cst_17 {dimension_numbers = #tpu.dot_dimension_numbers<[1], [0], [0], [1], [0, 0, 1, 1], [], []>} : vector<146x5xf32>, vector<5x32xf32>, vector<146x32xf32> -> vector<146x32xf32>
    %36 = vector.broadcast %2 : vector<1x32xf32> to vector<146x32xf32>
    %37 = arith.addf %35, %36 : vector<146x32xf32>
    %cst_18 = arith.constant dense<0.000000e+00> : vector<146xf32>
    %38 = vector.multi_reduction <add>, %32, %cst_18 [1] : vector<146x32xf32> to vector<146xf32>
    %39 = vector.shape_cast %38 : vector<146xf32> to vector<146x1xf32>
    %cst_19 = arith.constant 3.125000e-02 : f32
    %40 = vector.broadcast %cst_19 : f32 to vector<146x1xf32>
    %41 = arith.mulf %39, %40 : vector<146x1xf32>
    %42 = arith.mulf %32, %32 : vector<146x32xf32>
    %cst_20 = arith.constant dense<0.000000e+00> : vector<146xf32>
    %43 = vector.multi_reduction <add>, %42, %cst_20 [1] : vector<146x32xf32> to vector<146xf32>
    %44 = vector.shape_cast %43 : vector<146xf32> to vector<146x1xf32>
    %cst_21 = arith.constant 3.125000e-02 : f32
    %45 = vector.broadcast %cst_21 : f32 to vector<146x1xf32>
    %46 = arith.mulf %44, %45 : vector<146x1xf32>
    %47 = arith.mulf %41, %41 : vector<146x1xf32>
    %48 = arith.subf %46, %47 : vector<146x1xf32>
    %cst_22 = arith.constant 0.000000e+00 : f32
    %49 = vector.broadcast %cst_22 : f32 to vector<146x1xf32>
    %50 = arith.maximumf %48, %49 : vector<146x1xf32>
    %51 = vector.broadcast %41 : vector<146x1xf32> to vector<146x32xf32>
    %52 = arith.subf %32, %51 : vector<146x32xf32>
    %cst_23 = arith.constant 9.99999996E-13 : f32
    %53 = vector.broadcast %cst_23 : f32 to vector<146x1xf32>
    %54 = arith.addf %50, %53 : vector<146x1xf32>
    %55 = math.rsqrt %54 : vector<146x1xf32>
    %56 = vector.broadcast %55 : vector<146x1xf32> to vector<146x32xf32>
    %57 = arith.mulf %52, %56 : vector<146x32xf32>
    %58 = vector.broadcast %3 : vector<1x32xf32> to vector<146x32xf32>
    %59 = arith.mulf %57, %58 : vector<146x32xf32>
    %60 = vector.broadcast %4 : vector<1x32xf32> to vector<146x32xf32>
    %61 = arith.addf %59, %60 : vector<146x32xf32>
    %cst_24 = arith.constant dense<0.000000e+00> : vector<146xf32>
    %62 = vector.multi_reduction <add>, %37, %cst_24 [1] : vector<146x32xf32> to vector<146xf32>
    %63 = vector.shape_cast %62 : vector<146xf32> to vector<146x1xf32>
    %cst_25 = arith.constant 3.125000e-02 : f32
    %64 = vector.broadcast %cst_25 : f32 to vector<146x1xf32>
    %65 = arith.mulf %63, %64 : vector<146x1xf32>
    %66 = arith.mulf %37, %37 : vector<146x32xf32>
    %cst_26 = arith.constant dense<0.000000e+00> : vector<146xf32>
    %67 = vector.multi_reduction <add>, %66, %cst_26 [1] : vector<146x32xf32> to vector<146xf32>
    %68 = vector.shape_cast %67 : vector<146xf32> to vector<146x1xf32>
    %cst_27 = arith.constant 3.125000e-02 : f32
    %69 = vector.broadcast %cst_27 : f32 to vector<146x1xf32>
    %70 = arith.mulf %68, %69 : vector<146x1xf32>
    %71 = arith.mulf %65, %65 : vector<146x1xf32>
    %72 = arith.subf %70, %71 : vector<146x1xf32>
    %cst_28 = arith.constant 0.000000e+00 : f32
    %73 = vector.broadcast %cst_28 : f32 to vector<146x1xf32>
    %74 = arith.maximumf %72, %73 : vector<146x1xf32>
    %75 = vector.broadcast %65 : vector<146x1xf32> to vector<146x32xf32>
    %76 = arith.subf %37, %75 : vector<146x32xf32>
    %cst_29 = arith.constant 9.99999996E-13 : f32
    %77 = vector.broadcast %cst_29 : f32 to vector<146x1xf32>
    %78 = arith.addf %74, %77 : vector<146x1xf32>
    %79 = math.rsqrt %78 : vector<146x1xf32>
    %80 = vector.broadcast %79 : vector<146x1xf32> to vector<146x32xf32>
    %81 = arith.mulf %76, %80 : vector<146x32xf32>
    %82 = vector.broadcast %5 : vector<1x32xf32> to vector<146x32xf32>
    %83 = arith.mulf %81, %82 : vector<146x32xf32>
    %84 = vector.broadcast %6 : vector<1x32xf32> to vector<146x32xf32>
    %85 = arith.addf %83, %84 : vector<146x32xf32>
    %86 = arith.addf %61, %85 : vector<146x32xf32>
    %cst_30 = arith.constant dense<0.000000e+00> : vector<146xf32>
    %87 = vector.multi_reduction <add>, %86, %cst_30 [1] : vector<146x32xf32> to vector<146xf32>
    %88 = vector.shape_cast %87 : vector<146xf32> to vector<146x1xf32>
    %cst_31 = arith.constant 3.125000e-02 : f32
    %89 = vector.broadcast %cst_31 : f32 to vector<146x1xf32>
    %90 = arith.mulf %88, %89 : vector<146x1xf32>
    %91 = arith.mulf %86, %86 : vector<146x32xf32>
    %cst_32 = arith.constant dense<0.000000e+00> : vector<146xf32>
    %92 = vector.multi_reduction <add>, %91, %cst_32 [1] : vector<146x32xf32> to vector<146xf32>
    %93 = vector.shape_cast %92 : vector<146xf32> to vector<146x1xf32>
    %cst_33 = arith.constant 3.125000e-02 : f32
    %94 = vector.broadcast %cst_33 : f32 to vector<146x1xf32>
    %95 = arith.mulf %93, %94 : vector<146x1xf32>
    %96 = arith.mulf %90, %90 : vector<146x1xf32>
    %97 = arith.subf %95, %96 : vector<146x1xf32>
    %cst_34 = arith.constant 0.000000e+00 : f32
    %98 = vector.broadcast %cst_34 : f32 to vector<146x1xf32>
    %99 = arith.maximumf %97, %98 : vector<146x1xf32>
    %100 = vector.broadcast %90 : vector<146x1xf32> to vector<146x32xf32>
    %101 = arith.subf %86, %100 : vector<146x32xf32>
    %cst_35 = arith.constant 9.99999996E-13 : f32
    %102 = vector.broadcast %cst_35 : f32 to vector<146x1xf32>
    %103 = arith.addf %99, %102 : vector<146x1xf32>
    %104 = math.rsqrt %103 : vector<146x1xf32>
    %105 = vector.broadcast %104 : vector<146x1xf32> to vector<146x32xf32>
    %106 = arith.mulf %101, %105 : vector<146x32xf32>
    %107 = vector.broadcast %7 : vector<1x32xf32> to vector<146x32xf32>
    %108 = arith.mulf %106, %107 : vector<146x32xf32>
    %109 = vector.broadcast %8 : vector<1x32xf32> to vector<146x32xf32>
    %110 = arith.addf %108, %109 : vector<146x32xf32>
    %c0_36 = arith.constant 0 : index
    %c32 = arith.constant 32 : index
    %111 = vector.load %arg4[%c0_36, %c32] : memref<146x33xf32, #tpu.memory_space<vmem>>, vector<146x1xf32>
    %112 = vector.broadcast %111 : vector<146x1xf32> to vector<146x32xf32>
    %113 = arith.mulf %112, %110 : vector<146x32xf32>
    %114 = arith.addf %27, %113 : vector<146x32xf32>
    %cst_37 = arith.constant dense<0.000000e+00> : vector<146xf32>
    %115 = vector.multi_reduction <add>, %114, %cst_37 [1] : vector<146x32xf32> to vector<146xf32>
    %116 = vector.shape_cast %115 : vector<146xf32> to vector<146x1xf32>
    %cst_38 = arith.constant 3.125000e-02 : f32
    %117 = vector.broadcast %cst_38 : f32 to vector<146x1xf32>
    %118 = arith.mulf %116, %117 : vector<146x1xf32>
    %119 = arith.mulf %114, %114 : vector<146x32xf32>
    %cst_39 = arith.constant dense<0.000000e+00> : vector<146xf32>
    %120 = vector.multi_reduction <add>, %119, %cst_39 [1] : vector<146x32xf32> to vector<146xf32>
    %121 = vector.shape_cast %120 : vector<146xf32> to vector<146x1xf32>
    %cst_40 = arith.constant 3.125000e-02 : f32
    %122 = vector.broadcast %cst_40 : f32 to vector<146x1xf32>
    %123 = arith.mulf %121, %122 : vector<146x1xf32>
    %124 = arith.mulf %118, %118 : vector<146x1xf32>
    %125 = arith.subf %123, %124 : vector<146x1xf32>
    %cst_41 = arith.constant 0.000000e+00 : f32
    %126 = vector.broadcast %cst_41 : f32 to vector<146x1xf32>
    %127 = arith.maximumf %125, %126 : vector<146x1xf32>
    %128 = vector.broadcast %118 : vector<146x1xf32> to vector<146x32xf32>
    %129 = arith.subf %114, %128 : vector<146x32xf32>
    %cst_42 = arith.constant 9.99999996E-13 : f32
    %130 = vector.broadcast %cst_42 : f32 to vector<146x1xf32>
    %131 = arith.addf %127, %130 : vector<146x1xf32>
    %132 = math.rsqrt %131 : vector<146x1xf32>
    %133 = vector.broadcast %132 : vector<146x1xf32> to vector<146x32xf32>
    %134 = arith.mulf %129, %133 : vector<146x32xf32>
    %135 = vector.broadcast %9 : vector<1x32xf32> to vector<146x32xf32>
    %136 = arith.mulf %134, %135 : vector<146x32xf32>
    %137 = vector.broadcast %10 : vector<1x32xf32> to vector<146x32xf32>
    %138 = arith.addf %136, %137 : vector<146x32xf32>
    %c0_43 = arith.constant 0 : index
    %c0_44 = arith.constant 0 : index
    %139 = vector.load %arg9[%c0_43, %c0_44] : memref<146x32xf32, #tpu.memory_space<vmem>>, vector<146x32xf32>
    tpu.vector_store %arg9[%c0_43, %c0_44], %138 {strides = array<i32>} : memref<146x32xf32, #tpu.memory_space<vmem>>, vector<146x32xf32>,
    return
  }
  func.func @transform_0(%arg0: i32) -> (i32, i32) {
    %c0_i32 = arith.constant 0 : i32
    %c0_i32_0 = arith.constant 0 : i32
    return %arg0, %c0_i32 : i32, i32
  }
  func.func @transform_1(%arg0: i32) -> (i32, i32) {
    %c0_i32 = arith.constant 0 : i32
    %c0_i32_0 = arith.constant 0 : i32
    return %arg0, %c0_i32 : i32, i32
  }
  func.func @transform_2(%arg0: i32) -> (i32, i32) {
    %c0_i32 = arith.constant 0 : i32
    %c0_i32_0 = arith.constant 0 : i32
    return %arg0, %c0_i32 : i32, i32
  }
  func.func @transform_3(%arg0: i32) -> (i32, i32) {
    %c0_i32 = arith.constant 0 : i32
    %c0_i32_0 = arith.constant 0 : i32
    return %arg0, %c0_i32 : i32, i32
  }
  func.func @transform_4(%arg0: i32) -> (i32, i32) {
    %c0_i32 = arith.constant 0 : i32
    %c0_i32_0 = arith.constant 0 : i32
    %c0_i32_1 = arith.constant 0 : i32
    return %c0_i32, %c0_i32_0 : i32, i32
  }
  func.func @transform_5(%arg0: i32) -> (i32, i32) {
    %c0_i32 = arith.constant 0 : i32
    %c0_i32_0 = arith.constant 0 : i32
    %c0_i32_1 = arith.constant 0 : i32
    return %c0_i32, %c0_i32_0 : i32, i32
  }
  func.func @transform_6(%arg0: i32) -> (i32, i32) {
    %c0_i32 = arith.constant 0 : i32
    %c0_i32_0 = arith.constant 0 : i32
    %c0_i32_1 = arith.constant 0 : i32
    return %c0_i32, %c0_i32_0 : i32, i32
  }
  func.func @transform_7(%arg0: i32) -> (i32, i32) {
    %c0_i32 = arith.constant 0 : i32
    %c0_i32_0 = arith.constant 0 : i32
    %c0_i32_1 = arith.constant 0 : i32
    return %c0_i32, %c0_i32_0 : i32, i32
  }
  func.func @transform_8(%arg0: i32) -> (i32, i32) {
    %c0_i32 = arith.constant 0 : i32
    %c0_i32_0 = arith.constant 0 : i32
    return %arg0, %c0_i32 : i32, i32
  }
}

</mosaic_0001>

<llo_original>
// kernel: tpu_custom_call.1
$region0: #{tpu_custom_call.1}
  #allocation0 [shape = 'u32[]', space=smem, size = 0x4, offset = 0x4, fixed_abs, tag = 'smem constant byte address 0x4 - core index']
  #allocation1 [shape = 'u32[72,128]{1,0:T(1,128)}', space=vmem, size = 0x9000, scoped, tag = 'internal scratch']
  %s0 = inlined_call_operand.vmem [shape: s32[146,2], index: 0, kind: input, shape index: {}]
  %s1 = inlined_call_operand.vmem [shape: f32[146,16], index: 1, kind: input, shape index: {}]
  %s2 = inlined_call_operand.vmem [shape: f32[146,5], index: 2, kind: input, shape index: {}]
  %s3 = inlined_call_operand.vmem [shape: f32[146,33], index: 3, kind: input, shape index: {}]
  %s4 = inlined_call_operand.vmem [shape: bf16[66,32], index: 4, kind: input, shape index: {}]
  %s5 = inlined_call_operand.vmem [shape: f32[16,32], index: 5, kind: input, shape index: {}]
  %s6 = inlined_call_operand.vmem [shape: f32[5,32], index: 6, kind: input, shape index: {}]
  %s7 = inlined_call_operand.vmem [shape: f32[10,32], index: 7, kind: input, shape index: {}]
  %s8 = inlined_call_operand.vmem [shape: f32[146,32], index: 8, kind: output, shape index: {}]
  %s9 = sld [smem:[#allocation0]]
  $region42: #{tpu_custom_call.1} parent=0
    _
  %s11 = ssub.s32 1, %s9
  %s12 = scalar_select 0, %s11, %s9
  // Predicated region
  $region2: #{tpu_custom_call.1} parent=0 // pred_check
    _
  $region3: #{tpu_custom_call.1} parent=0 // pred_check_branch
    %14 = sbr.rel (0) target = $region5
  $region4: #{tpu_custom_call.1} parent=0 // pred_region
    _
  $region5: #{tpu_custom_call.1} parent=0 // pred_fallthru
    _
  // Predicated region
  $region6: #{tpu_custom_call.1} parent=0 // pred_check
    _
  $region7: #{tpu_custom_call.1} parent=0 // pred_check_branch
    %16 = sbr.rel (0) target = $region9
  $region8: #{tpu_custom_call.1} parent=0 // pred_region
    _
  $region9: #{tpu_custom_call.1} parent=0 // pred_fallthru
    _
  // Predicated region
  $region10: #{tpu_custom_call.1} parent=0 // pred_check
    _
  $region11: #{tpu_custom_call.1} parent=0 // pred_check_branch
    %18 = sbr.rel (0) target = $region13
  $region12: #{tpu_custom_call.1} parent=0 // pred_region
    _
  $region13: #{tpu_custom_call.1} parent=0 // pred_fallthru
    _
  // Predicated region
  $region14: #{tpu_custom_call.1} parent=0 // pred_check
    _
  $region15: #{tpu_custom_call.1} parent=0 // pred_check_branch
    %20 = sbr.rel (0) target = $region17
  $region16: #{tpu_custom_call.1} parent=0 // pred_region
    _
  $region17: #{tpu_custom_call.1} parent=0 // pred_fallthru
    _
  // Predicated region
  $region18: #{tpu_custom_call.1} parent=0 // pred_check
    _
  $region19: #{tpu_custom_call.1} parent=0 // pred_check_branch
    %22 = sbr.rel (0) target = $region21
  $region20: #{tpu_custom_call.1} parent=0 // pred_region
    _
  $region21: #{tpu_custom_call.1} parent=0 // pred_fallthru
    _
  // Predicated region
  $region22: #{tpu_custom_call.1} parent=0 // pred_check
    _
  $region23: #{tpu_custom_call.1} parent=0 // pred_check_branch
    %24 = sbr.rel (0) target = $region25
  $region24: #{tpu_custom_call.1} parent=0 // pred_region
    _
  $region25: #{tpu_custom_call.1} parent=0 // pred_fallthru
    _
  // Predicated region
  $region26: #{tpu_custom_call.1} parent=0 // pred_check
    _
  $region27: #{tpu_custom_call.1} parent=0 // pred_check_branch
    %26 = sbr.rel (0) target = $region29
  $region28: #{tpu_custom_call.1} parent=0 // pred_region
    _
  $region29: #{tpu_custom_call.1} parent=0 // pred_fallthru
    _
  // Predicated region
  $region30: #{tpu_custom_call.1} parent=0 // pred_check
    _
  $region31: #{tpu_custom_call.1} parent=0 // pred_check_branch
    %28 = sbr.rel (0) target = $region33
  $region32: #{tpu_custom_call.1} parent=0 // pred_region
    _
  $region33: #{tpu_custom_call.1} parent=0 // pred_fallthru
    _
  %v30 = vld [vmem:[%s7] sm:$0xff]
  %v31 = vld [vmem:[%s7 + $0x8] sm:$0x3]
  %v32 = vld [vmem:[%s0] sm:$0xff]
  %v33 = vld [vmem:[%s0 + $0x8] sm:$0xff]
  %v34 = vld [vmem:[%s0 + $0x10] sm:$0xff]
  %v35 = vld [vmem:[%s0 + $0x18] sm:$0xff]
  %v36 = vld [vmem:[%s0 + $0x20] sm:$0xff]
  %v37 = vld [vmem:[%s0 + $0x28] sm:$0xff]
  %v38 = vld [vmem:[%s0 + $0x30] sm:$0xff]
  %v39 = vld [vmem:[%s0 + $0x38] sm:$0xff]
  %v40 = vld [vmem:[%s0 + $0x40] sm:$0xff]
  %v41 = vld [vmem:[%s0 + $0x48] sm:$0xff]
  %v42 = vld [vmem:[%s0 + $0x50] sm:$0xff]
  %v43 = vld [vmem:[%s0 + $0x58] sm:$0xff]
  %v44 = vld [vmem:[%s0 + $0x60] sm:$0xff]
  %v45 = vld [vmem:[%s0 + $0x68] sm:$0xff]
  %v46 = vld [vmem:[%s0 + $0x70] sm:$0xff]
  %v47 = vld [vmem:[%s0 + $0x78] sm:$0xff]
  %v48 = vld [vmem:[%s0 + $0x80] sm:$0xff]
  %v49 = vld [vmem:[%s0 + $0x88] sm:$0xff]
  %v50 = vld [vmem:[%s0 + $0x90] sm:$0x3]
  %v51 = vadd.s32 %v32, 64
  %v52 = vadd.s32 %v33, 64
  %v53 = vadd.s32 %v34, 64
  %v54 = vadd.s32 %v35, 64
  %v55 = vadd.s32 %v36, 64
  %v56 = vadd.s32 %v37, 64
  %v57 = vadd.s32 %v38, 64
  %v58 = vadd.s32 %v39, 64
  %v59 = vadd.s32 %v40, 64
  %v60 = vadd.s32 %v41, 64
  %v61 = vadd.s32 %v42, 64
  %v62 = vadd.s32 %v43, 64
  %v63 = vadd.s32 %v44, 64
  %v64 = vadd.s32 %v45, 64
  %v65 = vadd.s32 %v46, 64
  %v66 = vadd.s32 %v47, 64
  %v67 = vadd.s32 %v48, 64
  %v68 = vadd.s32 %v49, 64
  %v69 = vadd.s32 %v50, 64
  %v70 = vlaneseq
  %v71 = vand.u32 %v70, 127
  %72 = vset.pattern.permute.xlu0 0
  %73 = vperm.xlu0 %72, %v32
  %v74 = vpop.permute.xlu0 %73
  %75 = vset.pattern.permute.xlu0 0
  %76 = vperm.xlu0 %75, %v33
  %v77 = vpop.permute.xlu0 %76
  %78 = vset.pattern.permute.xlu0 0
  %79 = vperm.xlu0 %78, %v34
  %v80 = vpop.permute.xlu0 %79
  %81 = vset.pattern.permute.xlu0 0
  %82 = vperm.xlu0 %81, %v35
  %v83 = vpop.permute.xlu0 %82
  %84 = vset.pattern.permute.xlu0 0
  %85 = vperm.xlu0 %84, %v36
  %v86 = vpop.permute.xlu0 %85
  %87 = vset.pattern.permute.xlu0 0
  %88 = vperm.xlu0 %87, %v37
  %v89 = vpop.permute.xlu0 %88
  %90 = vset.pattern.permute.xlu0 0
  %91 = vperm.xlu0 %90, %v38
  %v92 = vpop.permute.xlu0 %91
  %93 = vset.pattern.permute.xlu0 0
  %94 = vperm.xlu0 %93, %v39
  %v95 = vpop.permute.xlu0 %94
  %96 = vset.pattern.permute.xlu0 0
  %97 = vperm.xlu0 %96, %v40
  %v98 = vpop.permute.xlu0 %97
  %99 = vset.pattern.permute.xlu0 0
  %100 = vperm.xlu0 %99, %v41
  %v101 = vpop.permute.xlu0 %100
  %102 = vset.pattern.permute.xlu0 0
  %103 = vperm.xlu0 %102, %v42
  %v104 = vpop.permute.xlu0 %103
  %105 = vset.pattern.permute.xlu0 0
  %106 = vperm.xlu0 %105, %v43
  %v107 = vpop.permute.xlu0 %106
  %108 = vset.pattern.permute.xlu0 0
  %109 = vperm.xlu0 %108, %v44
  %v110 = vpop.permute.xlu0 %109
  %111 = vset.pattern.permute.xlu0 0
  %112 = vperm.xlu0 %111, %v45
  %v113 = vpop.permute.xlu0 %112
  %114 = vset.pattern.permute.xlu0 0
  %115 = vperm.xlu0 %114, %v46
  %v116 = vpop.permute.xlu0 %115
  %117 = vset.pattern.permute.xlu0 0
  %118 = vperm.xlu0 %117, %v47
  %v119 = vpop.permute.xlu0 %118
  %120 = vset.pattern.permute.xlu0 0
  %121 = vperm.xlu0 %120, %v48
  %v122 = vpop.permute.xlu0 %121
  %123 = vset.pattern.permute.xlu0 0
  %124 = vperm.xlu0 %123, %v49
  %v125 = vpop.permute.xlu0 %124
  %126 = vset.pattern.permute.xlu0 0
  %127 = vperm.xlu0 %126, %v50
  %v128 = vpop.permute.xlu0 %127
  %vm129 = vcmp.eq.s32.totalorder %v71, %v74
  %vm130 = vcmp.eq.s32.totalorder %v71, %v77
  %vm131 = vcmp.eq.s32.totalorder %v71, %v80
  %vm132 = vcmp.eq.s32.totalorder %v71, %v83
  %vm133 = vcmp.eq.s32.totalorder %v71, %v86
  %vm134 = vcmp.eq.s32.totalorder %v71, %v89
  %vm135 = vcmp.eq.s32.totalorder %v71, %v92
  %vm136 = vcmp.eq.s32.totalorder %v71, %v95
  %vm137 = vcmp.eq.s32.totalorder %v71, %v98
  %vm138 = vcmp.eq.s32.totalorder %v71, %v101
  %vm139 = vcmp.eq.s32.totalorder %v71, %v104
  %vm140 = vcmp.eq.s32.totalorder %v71, %v107
  %vm141 = vcmp.eq.s32.totalorder %v71, %v110
  %vm142 = vcmp.eq.s32.totalorder %v71, %v113
  %vm143 = vcmp.eq.s32.totalorder %v71, %v116
  %vm144 = vcmp.eq.s32.totalorder %v71, %v119
  %vm145 = vcmp.eq.s32.totalorder %v71, %v122
  %vm146 = vcmp.eq.s32.totalorder %v71, %v125
  %vm147 = vcmp.eq.s32.totalorder %v71, %v128
  %148 = vset.pattern.permute.xlu0 1
  %149 = vperm.xlu0 %148, %v51
  %v150 = vpop.permute.xlu0 %149
  %151 = vset.pattern.permute.xlu0 1
  %152 = vperm.xlu0 %151, %v52
  %v153 = vpop.permute.xlu0 %152
  %154 = vset.pattern.permute.xlu0 1
  %155 = vperm.xlu0 %154, %v53
  %v156 = vpop.permute.xlu0 %155
  %157 = vset.pattern.permute.xlu0 1
  %158 = vperm.xlu0 %157, %v54
  %v159 = vpop.permute.xlu0 %158
  %160 = vset.pattern.permute.xlu0 1
  %161 = vperm.xlu0 %160, %v55
  %v162 = vpop.permute.xlu0 %161
  %163 = vset.pattern.permute.xlu0 1
  %164 = vperm.xlu0 %163, %v56
  %v165 = vpop.permute.xlu0 %164
  %166 = vset.pattern.permute.xlu0 1
  %167 = vperm.xlu0 %166, %v57
  %v168 = vpop.permute.xlu0 %167
  %169 = vset.pattern.permute.xlu0 1
  %170 = vperm.xlu0 %169, %v58
  %v171 = vpop.permute.xlu0 %170
  %172 = vset.pattern.permute.xlu0 1
  %173 = vperm.xlu0 %172, %v59
  %v174 = vpop.permute.xlu0 %173
  %175 = vset.pattern.permute.xlu0 1
  %176 = vperm.xlu0 %175, %v60
  %v177 = vpop.permute.xlu0 %176
  %178 = vset.pattern.permute.xlu0 1
  %179 = vperm.xlu0 %178, %v61
  %v180 = vpop.permute.xlu0 %179
  %181 = vset.pattern.permute.xlu0 1
  %182 = vperm.xlu0 %181, %v62
  %v183 = vpop.permute.xlu0 %182
  %184 = vset.pattern.permute.xlu0 1
  %185 = vperm.xlu0 %184, %v63
  %v186 = vpop.permute.xlu0 %185
  %187 = vset.pattern.permute.xlu0 1
  %188 = vperm.xlu0 %187, %v64
  %v189 = vpop.permute.xlu0 %188
  %190 = vset.pattern.permute.xlu0 1
  %191 = vperm.xlu0 %190, %v65
  %v192 = vpop.permute.xlu0 %191
  %193 = vset.pattern.permute.xlu0 1
  %194 = vperm.xlu0 %193, %v66
  %v195 = vpop.permute.xlu0 %194
  %196 = vset.pattern.permute.xlu0 1
  %197 = vperm.xlu0 %196, %v67
  %v198 = vpop.permute.xlu0 %197
  %199 = vset.pattern.permute.xlu0 1
  %200 = vperm.xlu0 %199, %v68
  %v201 = vpop.permute.xlu0 %200
  %202 = vset.pattern.permute.xlu0 1
  %203 = vperm.xlu0 %202, %v69
  %v204 = vpop.permute.xlu0 %203
  %vm205 = vcmp.eq.s32.totalorder %v71, %v150
  %vm206 = vcmp.eq.s32.totalorder %v71, %v153
  %vm207 = vcmp.eq.s32.totalorder %v71, %v156
  %vm208 = vcmp.eq.s32.totalorder %v71, %v159
  %vm209 = vcmp.eq.s32.totalorder %v71, %v162
  %vm210 = vcmp.eq.s32.totalorder %v71, %v165
  %vm211 = vcmp.eq.s32.totalorder %v71, %v168
  %vm212 = vcmp.eq.s32.totalorder %v71, %v171
  %vm213 = vcmp.eq.s32.totalorder %v71, %v174
  %vm214 = vcmp.eq.s32.totalorder %v71, %v177
  %vm215 = vcmp.eq.s32.totalorder %v71, %v180
  %vm216 = vcmp.eq.s32.totalorder %v71, %v183
  %vm217 = vcmp.eq.s32.totalorder %v71, %v186
  %vm218 = vcmp.eq.s32.totalorder %v71, %v189
  %vm219 = vcmp.eq.s32.totalorder %v71, %v192
  %vm220 = vcmp.eq.s32.totalorder %v71, %v195
  %vm221 = vcmp.eq.s32.totalorder %v71, %v198
  %vm222 = vcmp.eq.s32.totalorder %v71, %v201
  %vm223 = vcmp.eq.s32.totalorder %v71, %v204
  %vm224 = vmor %vm129, %vm205
  %vm225 = vmor %vm130, %vm206
  %vm226 = vmor %vm131, %vm207
  %vm227 = vmor %vm132, %vm208
  %vm228 = vmor %vm133, %vm209
  %vm229 = vmor %vm134, %vm210
  %vm230 = vmor %vm135, %vm211
  %vm231 = vmor %vm136, %vm212
  %vm232 = vmor %vm137, %vm213
  %vm233 = vmor %vm138, %vm214
  %vm234 = vmor %vm139, %vm215
  %vm235 = vmor %vm140, %vm216
  %vm236 = vmor %vm141, %vm217
  %vm237 = vmor %vm142, %vm218
  %vm238 = vmor %vm143, %vm219
  %vm239 = vmor %vm144, %vm220
  %vm240 = vmor %vm145, %vm221
  %vm241 = vmor %vm146, %vm222
  %vm242 = vmor %vm147, %vm223
  %v243 = vsel %vm224, 1, 0
  %v244 = vsel %vm225, 1, 0
  %v245 = vsel %vm226, 1, 0
  %v246 = vsel %vm227, 1, 0
  %v247 = vsel %vm228, 1, 0
  %v248 = vsel %vm229, 1, 0
  %v249 = vsel %vm230, 1, 0
  %v250 = vsel %vm231, 1, 0
  %v251 = vsel %vm232, 1, 0
  %v252 = vsel %vm233, 1, 0
  %v253 = vsel %vm234, 1, 0
  %v254 = vsel %vm235, 1, 0
  %v255 = vsel %vm236, 1, 0
  %v256 = vsel %vm237, 1, 0
  %v257 = vsel %vm238, 1, 0
  %v258 = vsel %vm239, 1, 0
  %v259 = vsel %vm240, 1, 0
  %v260 = vsel %vm241, 1, 0
  %v261 = vsel %vm242, 1, 0
  %v262 = vcvt.s32.f32 %v243
  %v263 = vcvt.s32.f32 %v244
  %v264 = vcvt.s32.f32 %v245
  %v265 = vcvt.s32.f32 %v246
  %v266 = vcvt.s32.f32 %v247
  %v267 = vcvt.s32.f32 %v248
  %v268 = vcvt.s32.f32 %v249
  %v269 = vcvt.s32.f32 %v250
  %v270 = vcvt.s32.f32 %v251
  %v271 = vcvt.s32.f32 %v252
  %v272 = vcvt.s32.f32 %v253
  %v273 = vcvt.s32.f32 %v254
  %v274 = vcvt.s32.f32 %v255
  %v275 = vcvt.s32.f32 %v256
  %v276 = vcvt.s32.f32 %v257
  %v277 = vcvt.s32.f32 %v258
  %v278 = vcvt.s32.f32 %v259
  %v279 = vcvt.s32.f32 %v260
  %v280 = vcvt.s32.f32 %v261
  %v281 = vpack.c.bf16 %v263, %v262
  %v282 = vpack.c.bf16 %v265, %v264
  %v283 = vpack.c.bf16 %v267, %v266
  %v284 = vpack.c.bf16 %v269, %v268
  %v285 = vpack.c.bf16 %v271, %v270
  %v286 = vpack.c.bf16 %v273, %v272
  %v287 = vpack.c.bf16 %v275, %v274
  %v288 = vpack.c.bf16 %v277, %v276
  %v289 = vpack.c.bf16 %v279, %v278
  %v290 = vpack.c.bf16 %v280, %v280
  %v291 = vld [vmem:[%s4] sm:$0xf]
  %v292 = vld [vmem:[%s4 + $0x4] sm:$0xf]
  %v293 = vld [vmem:[%s4 + $0x8] sm:$0xf]
  %v294 = vld [vmem:[%s4 + $0xc] sm:$0xf]
  %v295 = vld [vmem:[%s4 + $0x10] sm:$0xf]
  %v296 = vld [vmem:[%s4 + $0x14] sm:$0xf]
  %v297 = vld [vmem:[%s4 + $0x18] sm:$0xf]
  %v298 = vld [vmem:[%s4 + $0x1c] sm:$0xf]
  %v299 = vld [vmem:[%s4 + $0x20] sm:$0x1]
  %v300 = vld [vmem:[%s3] sm:$0xff]
  %v301 = vld [vmem:[%s3 + $0x8] sm:$0xff]
  %v302 = vld [vmem:[%s3 + $0x10] sm:$0xff]
  %v303 = vld [vmem:[%s3 + $0x18] sm:$0xff]
  %v304 = vld [vmem:[%s3 + $0x20] sm:$0xff]
  %v305 = vld [vmem:[%s3 + $0x28] sm:$0xff]
  %v306 = vld [vmem:[%s3 + $0x30] sm:$0xff]
  %v307 = vld [vmem:[%s3 + $0x38] sm:$0xff]
  %v308 = vld [vmem:[%s3 + $0x40] sm:$0xff]
  %v309 = vld [vmem:[%s3 + $0x48] sm:$0xff]
  %v310 = vld [vmem:[%s3 + $0x50] sm:$0xff]
  %v311 = vld [vmem:[%s3 + $0x58] sm:$0xff]
  %v312 = vld [vmem:[%s3 + $0x60] sm:$0xff]
  %v313 = vld [vmem:[%s3 + $0x68] sm:$0xff]
  %v314 = vld [vmem:[%s3 + $0x70] sm:$0xff]
  %v315 = vld [vmem:[%s3 + $0x78] sm:$0xff]
  %v316 = vld [vmem:[%s3 + $0x80] sm:$0xff]
  %v317 = vld [vmem:[%s3 + $0x88] sm:$0xff]
  %v318 = vld [vmem:[%s3 + $0x90] sm:$0x3]
  %v328 = vunpack.c.l.b16 %v291
  %v329 = vunpack.c.l.b16 %v292
  %v330 = vunpack.c.l.b16 %v293
  %v331 = vunpack.c.l.b16 %v294
  %v332 = vunpack.c.l.b16 %v295
  %v333 = vunpack.c.l.b16 %v296
  %v334 = vunpack.c.l.b16 %v297
  %v335 = vunpack.c.l.b16 %v298
  %v336 = vunpack.c.l.b16 %v299
  %v337 = vpack.c.b16 %v329, %v328
  %v338 = vpack.c.b16 %v331, %v330
  %v339 = vpack.c.b16 %v333, %v332
  %v340 = vpack.c.b16 %v335, %v334
  %v341 = vpack.c.b16 %v336, %v336
  %vm346 = vcmask 539648
  %v348 = vsel %vm346, %v281, 0
  %v351 = vsel %vm346, %v282, 0
  %v354 = vsel %vm346, %v283, 0
  %v357 = vsel %vm346, %v284, 0
  %v360 = vsel %vm346, %v285, 0
  %v363 = vsel %vm346, %v286, 0
  %v366 = vsel %vm346, %v287, 0
  %v369 = vsel %vm346, %v288, 0
  %v372 = vsel %vm346, %v289, 0
  %v375 = vsel %vm346, %v290, 0
  %vm377 = vcmask 1040384
  %v379 = vsel %vm377, %v341, 0
  %381 = vmatpush.bf16.msra.mxu0 0
  %382 = vmatpush.bf16.msra.mxu0 0
  %383 = vmatpush.bf16.msra.mxu0 0
  %384 = vmatpush.bf16.msra.mxu0 %v379
  %385 = vmatpush.bf16.msra.mxu0 %v340
  %386 = vmatpush.bf16.msra.mxu0 %v339
  %387 = vmatpush.bf16.msra.mxu0 %v338
  %388 = vmatpush.bf16.msra.mxu0 %v337
  %389 = vmatmul.bf16.gmra.mxu0 %v348
  %v390 = vpop.f32.mrf.mxu0
  %v391 = vadd.f32 %v300, %v390
  %v392 = vpop.f32.mrf.mxu0
  %v393 = vadd.f32 %v301, %v392
  %394 = vmatmul.bf16.gmra.mxu0 %v351
  %v395 = vpop.f32.mrf.mxu0
  %v396 = vadd.f32 %v302, %v395
  %v397 = vpop.f32.mrf.mxu0
  %v398 = vadd.f32 %v303, %v397
  %399 = vmatmul.bf16.gmra.mxu0 %v354
  %v400 = vpop.f32.mrf.mxu0
  %v401 = vadd.f32 %v304, %v400
  %v402 = vpop.f32.mrf.mxu0
  %v403 = vadd.f32 %v305, %v402
  %404 = vmatmul.bf16.gmra.mxu0 %v357
  %v405 = vpop.f32.mrf.mxu0
  %v406 = vadd.f32 %v306, %v405
  %v407 = vpop.f32.mrf.mxu0
  %v408 = vadd.f32 %v307, %v407
  %409 = vmatmul.bf16.gmra.mxu0 %v360
  %v410 = vpop.f32.mrf.mxu0
  %v411 = vadd.f32 %v308, %v410
  %v412 = vpop.f32.mrf.mxu0
  %v413 = vadd.f32 %v309, %v412
  %414 = vmatmul.bf16.gmra.mxu0 %v363
  %v415 = vpop.f32.mrf.mxu0
  %v416 = vadd.f32 %v310, %v415
  %v417 = vpop.f32.mrf.mxu0
  %v418 = vadd.f32 %v311, %v417
  %419 = vmatmul.bf16.gmra.mxu0 %v366
  %v420 = vpop.f32.mrf.mxu0
  %v421 = vadd.f32 %v312, %v420
  %v422 = vpop.f32.mrf.mxu0
  %v423 = vadd.f32 %v313, %v422
  %424 = vmatmul.bf16.gmra.mxu0 %v369
  %v425 = vpop.f32.mrf.mxu0
  %v426 = vadd.f32 %v314, %v425
  %v427 = vpop.f32.mrf.mxu0
  %v428 = vadd.f32 %v315, %v427
  %429 = vmatmul.bf16.gmra.mxu0 %v372
  %v430 = vpop.f32.mrf.mxu0
  %v431 = vadd.f32 %v316, %v430
  %v432 = vpop.f32.mrf.mxu0
  %v433 = vadd.f32 %v317, %v432
  %434 = vmatmul.bf16.gmra.mxu0 %v375
  %v435 = vpop.f32.mrf.mxu0
  %v436 = vadd.f32 %v318, %v435
  %v437 = vpop.f32.mrf.mxu0
  %438 = vdwg.mxu0
  %v439 = vld [vmem:[%s1] sm:$0xff]
  %v440 = vld [vmem:[%s1 + $0x8] sm:$0xff]
  %v441 = vld [vmem:[%s1 + $0x10] sm:$0xff]
  %v442 = vld [vmem:[%s1 + $0x18] sm:$0xff]
  %v443 = vld [vmem:[%s1 + $0x20] sm:$0xff]
  %v444 = vld [vmem:[%s1 + $0x28] sm:$0xff]
  %v445 = vld [vmem:[%s1 + $0x30] sm:$0xff]
  %v446 = vld [vmem:[%s1 + $0x38] sm:$0xff]
  %v447 = vld [vmem:[%s1 + $0x40] sm:$0xff]
  %v448 = vld [vmem:[%s1 + $0x48] sm:$0xff]
  %v449 = vld [vmem:[%s1 + $0x50] sm:$0xff]
  %v450 = vld [vmem:[%s1 + $0x58] sm:$0xff]
  %v451 = vld [vmem:[%s1 + $0x60] sm:$0xff]
  %v452 = vld [vmem:[%s1 + $0x68] sm:$0xff]
  %v453 = vld [vmem:[%s1 + $0x70] sm:$0xff]
  %v454 = vld [vmem:[%s1 + $0x78] sm:$0xff]
  %v455 = vld [vmem:[%s1 + $0x80] sm:$0xff]
  %v456 = vld [vmem:[%s1 + $0x88] sm:$0xff]
  %v457 = vld [vmem:[%s1 + $0x90] sm:$0x3]
  %v458 = vld [vmem:[%s5] sm:$0xff]
  %v459 = vld [vmem:[%s5 + $0x8] sm:$0xff]
  %v460 = vperm.slane %v30, 0
  %vm461 = vcmask 130048
  %v463 = vsel %vm461, %v439, 0
  %v466 = vsel %vm461, %v440, 0
  %v469 = vsel %vm461, %v441, 0
  %v472 = vsel %vm461, %v442, 0
  %v475 = vsel %vm461, %v443, 0
  %v478 = vsel %vm461, %v444, 0
  %v481 = vsel %vm461, %v445, 0
  %v484 = vsel %vm461, %v446, 0
  %v487 = vsel %vm461, %v447, 0
  %v490 = vsel %vm461, %v448, 0
  %v493 = vsel %vm461, %v449, 0
  %v496 = vsel %vm461, %v450, 0
  %v499 = vsel %vm461, %v451, 0
  %v502 = vsel %vm461, %v452, 0
  %v505 = vsel %vm461, %v453, 0
  %v508 = vsel %vm461, %v454, 0
  %v511 = vsel %vm461, %v455, 0
  %v514 = vsel %vm461, %v456, 0
  %v517 = vsel %vm461, %v457, 0
  %519 = vmatpush.msra.mxu0 0.0
  %520 = vmatpush.msra.mxu0 0.0
  %521 = vmatpush.msra.mxu0 0.0
  %522 = vmatpush.msra.mxu0 0.0
  %523 = vmatpush.msra.mxu0 0.0
  %524 = vmatpush.msra.mxu0 0.0
  %525 = vmatpush.msra.mxu0 0.0
  %526 = vmatpush.msra.mxu0 0.0
  %527 = vmatpush.msra.mxu0 0.0
  %528 = vmatpush.msra.mxu0 0.0
  %529 = vmatpush.msra.mxu0 0.0
  %530 = vmatpush.msra.mxu0 0.0
  %531 = vmatpush.msra.mxu0 0.0
  %532 = vmatpush.msra.mxu0 0.0
  %533 = vmatpush.msra.mxu0 %v459
  %534 = vmatpush.msra.mxu0 %v458
  %535 = vmatmul.f32.gmra.mxu0 %v463
  %v536 = vpop.f32.mrf.mxu0
  %v537 = vadd.f32 %v460, %v536
  %538 = vmatmul.f32.gmra.mxu0 %v466
  %v539 = vpop.f32.mrf.mxu0
  %v540 = vadd.f32 %v460, %v539
  %541 = vmatmul.f32.gmra.mxu0 %v469
  %v542 = vpop.f32.mrf.mxu0
  %v543 = vadd.f32 %v460, %v542
  %544 = vmatmul.f32.gmra.mxu0 %v472
  %v545 = vpop.f32.mrf.mxu0
  %v546 = vadd.f32 %v460, %v545
  %547 = vmatmul.f32.gmra.mxu0 %v475
  %v548 = vpop.f32.mrf.mxu0
  %v549 = vadd.f32 %v460, %v548
  %550 = vmatmul.f32.gmra.mxu0 %v478
  %v551 = vpop.f32.mrf.mxu0
  %v552 = vadd.f32 %v460, %v551
  %553 = vmatmul.f32.gmra.mxu0 %v481
  %v554 = vpop.f32.mrf.mxu0
  %v555 = vadd.f32 %v460, %v554
  %556 = vmatmul.f32.gmra.mxu0 %v484
  %v557 = vpop.f32.mrf.mxu0
  %v558 = vadd.f32 %v460, %v557
  %559 = vmatmul.f32.gmra.mxu0 %v487
  %v560 = vpop.f32.mrf.mxu0
  %v561 = vadd.f32 %v460, %v560
  %562 = vmatmul.f32.gmra.mxu0 %v490
  %v563 = vpop.f32.mrf.mxu0
  %v564 = vadd.f32 %v460, %v563
  %565 = vmatmul.f32.gmra.mxu0 %v493
  %v566 = vpop.f32.mrf.mxu0
  %v567 = vadd.f32 %v460, %v566
  %568 = vmatmul.f32.gmra.mxu0 %v496
  %v569 = vpop.f32.mrf.mxu0
  %v570 = vadd.f32 %v460, %v569
  %571 = vmatmul.f32.gmra.mxu0 %v499
  %v572 = vpop.f32.mrf.mxu0
  %v573 = vadd.f32 %v460, %v572
  %574 = vmatmul.f32.gmra.mxu0 %v502
  %v575 = vpop.f32.mrf.mxu0
  %v576 = vadd.f32 %v460, %v575
  %577 = vmatmul.f32.gmra.mxu0 %v505
  %v578 = vpop.f32.mrf.mxu0
  %v579 = vadd.f32 %v460, %v578
  %580 = vmatmul.f32.gmra.mxu0 %v508
  %v581 = vpop.f32.mrf.mxu0
  %v582 = vadd.f32 %v460, %v581
  %583 = vmatmul.f32.gmra.mxu0 %v511
  %v584 = vpop.f32.mrf.mxu0
  %v585 = vadd.f32 %v460, %v584
  %586 = vmatmul.f32.gmra.mxu0 %v514
  %v587 = vpop.f32.mrf.mxu0
  %v588 = vadd.f32 %v460, %v587
  %589 = vmatmul.f32.gmra.mxu0 %v517
  %v590 = vpop.f32.mrf.mxu0
  %v591 = vadd.f32 %v460, %v590
  %592 = vdwg.mxu0
  %v593 = vld [vmem:[%s2] sm:$0xff]
  %v594 = vld [vmem:[%s2 + $0x8] sm:$0xff]
  %v595 = vld [vmem:[%s2 + $0x10] sm:$0xff]
  %v596 = vld [vmem:[%s2 + $0x18] sm:$0xff]
  %v597 = vld [vmem:[%s2 + $0x20] sm:$0xff]
  %v598 = vld [vmem:[%s2 + $0x28] sm:$0xff]
  %v599 = vld [vmem:[%s2 + $0x30] sm:$0xff]
  %v600 = vld [vmem:[%s2 + $0x38] sm:$0xff]
  %v601 = vld [vmem:[%s2 + $0x40] sm:$0xff]
  %v602 = vld [vmem:[%s2 + $0x48] sm:$0xff]
  %v603 = vld [vmem:[%s2 + $0x50] sm:$0xff]
  %v604 = vld [vmem:[%s2 + $0x58] sm:$0xff]
  %v605 = vld [vmem:[%s2 + $0x60] sm:$0xff]
  %v606 = vld [vmem:[%s2 + $0x68] sm:$0xff]
  %v607 = vld [vmem:[%s2 + $0x70] sm:$0xff]
  %v608 = vld [vmem:[%s2 + $0x78] sm:$0xff]
  %v609 = vld [vmem:[%s2 + $0x80] sm:$0xff]
  %v610 = vld [vmem:[%s2 + $0x88] sm:$0xff]
  %v611 = vld [vmem:[%s2 + $0x90] sm:$0x3]
  %v612 = vld [vmem:[%s6] sm:$0x1f]
  %v613 = vperm.slane %v30, 1
  %vm614 = vcmask 39936
  %v616 = vsel %vm614, %v593, 0
  %v619 = vsel %vm614, %v594, 0
  %v622 = vsel %vm614, %v595, 0
  %v625 = vsel %vm614, %v596, 0
  %v628 = vsel %vm614, %v597, 0
  %v631 = vsel %vm614, %v598, 0
  %v634 = vsel %vm614, %v599, 0
  %v637 = vsel %vm614, %v600, 0
  %v640 = vsel %vm614, %v601, 0
  %v643 = vsel %vm614, %v602, 0
  %v646 = vsel %vm614, %v603, 0
  %v649 = vsel %vm614, %v604, 0
  %v652 = vsel %vm614, %v605, 0
  %v655 = vsel %vm614, %v606, 0
  %v658 = vsel %vm614, %v607, 0
  %v661 = vsel %vm614, %v608, 0
  %v664 = vsel %vm614, %v609, 0
  %v667 = vsel %vm614, %v610, 0
  %v670 = vsel %vm614, %v611, 0
  %vm672 = vcmask 1044480
  %v674 = vsel %vm672, %v612, 0
  %676 = vmatpush.msra.mxu0 0.0
  %677 = vmatpush.msra.mxu0 0.0
  %678 = vmatpush.msra.mxu0 0.0
  %679 = vmatpush.msra.mxu0 0.0
  %680 = vmatpush.msra.mxu0 0.0
  %681 = vmatpush.msra.mxu0 0.0
  %682 = vmatpush.msra.mxu0 0.0
  %683 = vmatpush.msra.mxu0 0.0
  %684 = vmatpush.msra.mxu0 0.0
  %685 = vmatpush.msra.mxu0 0.0
  %686 = vmatpush.msra.mxu0 0.0
  %687 = vmatpush.msra.mxu0 0.0
  %688 = vmatpush.msra.mxu0 0.0
  %689 = vmatpush.msra.mxu0 0.0
  %690 = vmatpush.msra.mxu0 0.0
  %691 = vmatpush.msra.mxu0 %v674
  %692 = vmatmul.f32.gmra.mxu0 %v616
  %v693 = vpop.f32.mrf.mxu0
  %v694 = vadd.f32 %v613, %v693
  %695 = vmatmul.f32.gmra.mxu0 %v619
  %v696 = vpop.f32.mrf.mxu0
  %v697 = vadd.f32 %v613, %v696
  %698 = vmatmul.f32.gmra.mxu0 %v622
  %v699 = vpop.f32.mrf.mxu0
  %v700 = vadd.f32 %v613, %v699
  %701 = vmatmul.f32.gmra.mxu0 %v625
  %v702 = vpop.f32.mrf.mxu0
  %v703 = vadd.f32 %v613, %v702
  %704 = vmatmul.f32.gmra.mxu0 %v628
  %v705 = vpop.f32.mrf.mxu0
  %v706 = vadd.f32 %v613, %v705
  %707 = vmatmul.f32.gmra.mxu0 %v631
  %v708 = vpop.f32.mrf.mxu0
  %v709 = vadd.f32 %v613, %v708
  %710 = vmatmul.f32.gmra.mxu0 %v634
  %v711 = vpop.f32.mrf.mxu0
  %v712 = vadd.f32 %v613, %v711
  %713 = vmatmul.f32.gmra.mxu0 %v637
  %v714 = vpop.f32.mrf.mxu0
  %v715 = vadd.f32 %v613, %v714
  %716 = vmatmul.f32.gmra.mxu0 %v640
  %v717 = vpop.f32.mrf.mxu0
  %v718 = vadd.f32 %v613, %v717
  %719 = vmatmul.f32.gmra.mxu0 %v643
  %v720 = vpop.f32.mrf.mxu0
  %v721 = vadd.f32 %v613, %v720
  %722 = vmatmul.f32.gmra.mxu0 %v646
  %v723 = vpop.f32.mrf.mxu0
  %v724 = vadd.f32 %v613, %v723
  %725 = vmatmul.f32.gmra.mxu0 %v649
  %v726 = vpop.f32.mrf.mxu0
  %v727 = vadd.f32 %v613, %v726
  %728 = vmatmul.f32.gmra.mxu0 %v652
  %v729 = vpop.f32.mrf.mxu0
  %v730 = vadd.f32 %v613, %v729
  %731 = vmatmul.f32.gmra.mxu0 %v655
  %v732 = vpop.f32.mrf.mxu0
  %v733 = vadd.f32 %v613, %v732
  %734 = vmatmul.f32.gmra.mxu0 %v658
  %v735 = vpop.f32.mrf.mxu0
  %v736 = vadd.f32 %v613, %v735
  %737 = vmatmul.f32.gmra.mxu0 %v661
  %v738 = vpop.f32.mrf.mxu0
  %v739 = vadd.f32 %v613, %v738
  %740 = vmatmul.f32.gmra.mxu0 %v664
  %v741 = vpop.f32.mrf.mxu0
  %v742 = vadd.f32 %v613, %v741
  %743 = vmatmul.f32.gmra.mxu0 %v667
  %v744 = vpop.f32.mrf.mxu0
  %v745 = vadd.f32 %v613, %v744
  %746 = vmatmul.f32.gmra.mxu0 %v670
  %v747 = vpop.f32.mrf.mxu0
  %v748 = vadd.f32 %v613, %v747
  %749 = vdwg.mxu0
  %vm750 = vcmask 261120
  %v751 = vsel %vm750, %v537, 0.0
  %752 = vadd.xlane.f32.xlu0 %v751
  %v753 = vpop.xlane.xlu0 %752
  %v754 = vsel %vm750, %v540, 0.0
  %755 = vadd.xlane.f32.xlu0 %v754
  %v756 = vpop.xlane.xlu0 %755
  %v757 = vsel %vm750, %v543, 0.0
  %758 = vadd.xlane.f32.xlu0 %v757
  %v759 = vpop.xlane.xlu0 %758
  %v760 = vsel %vm750, %v546, 0.0
  %761 = vadd.xlane.f32.xlu0 %v760
  %v762 = vpop.xlane.xlu0 %761
  %v763 = vsel %vm750, %v549, 0.0
  %764 = vadd.xlane.f32.xlu0 %v763
  %v765 = vpop.xlane.xlu0 %764
  %v766 = vsel %vm750, %v552, 0.0
  %767 = vadd.xlane.f32.xlu0 %v766
  %v768 = vpop.xlane.xlu0 %767
  %v769 = vsel %vm750, %v555, 0.0
  %770 = vadd.xlane.f32.xlu0 %v769
  %v771 = vpop.xlane.xlu0 %770
  %v772 = vsel %vm750, %v558, 0.0
  %773 = vadd.xlane.f32.xlu0 %v772
  %v774 = vpop.xlane.xlu0 %773
  %v775 = vsel %vm750, %v561, 0.0
  %776 = vadd.xlane.f32.xlu0 %v775
  %v777 = vpop.xlane.xlu0 %776
  %v778 = vsel %vm750, %v564, 0.0
  %779 = vadd.xlane.f32.xlu0 %v778
  %v780 = vpop.xlane.xlu0 %779
  %v781 = vsel %vm750, %v567, 0.0
  %782 = vadd.xlane.f32.xlu0 %v781
  %v783 = vpop.xlane.xlu0 %782
  %v784 = vsel %vm750, %v570, 0.0
  %785 = vadd.xlane.f32.xlu0 %v784
  %v786 = vpop.xlane.xlu0 %785
  %v787 = vsel %vm750, %v573, 0.0
  %788 = vadd.xlane.f32.xlu0 %v787
  %v789 = vpop.xlane.xlu0 %788
  %v790 = vsel %vm750, %v576, 0.0
  %791 = vadd.xlane.f32.xlu0 %v790
  %v792 = vpop.xlane.xlu0 %791
  %v793 = vsel %vm750, %v579, 0.0
  %794 = vadd.xlane.f32.xlu0 %v793
  %v795 = vpop.xlane.xlu0 %794
  %v796 = vsel %vm750, %v582, 0.0
  %797 = vadd.xlane.f32.xlu0 %v796
  %v798 = vpop.xlane.xlu0 %797
  %v799 = vsel %vm750, %v585, 0.0
  %800 = vadd.xlane.f32.xlu0 %v799
  %v801 = vpop.xlane.xlu0 %800
  %v802 = vsel %vm750, %v588, 0.0
  %803 = vadd.xlane.f32.xlu0 %v802
  %v804 = vpop.xlane.xlu0 %803
  %vm805 = vcmask 254976
  %v806 = vsel %vm805, %v591, 0.0
  %807 = vadd.xlane.f32.xlu0 %v806
  %v808 = vpop.xlane.xlu0 %807
  %v809 = vmul.f32 %v753, 0.03125
  %v810 = vmul.f32 %v756, 0.03125
  %v811 = vmul.f32 %v759, 0.03125
  %v812 = vmul.f32 %v762, 0.03125
  %v813 = vmul.f32 %v765, 0.03125
  %v814 = vmul.f32 %v768, 0.03125
  %v815 = vmul.f32 %v771, 0.03125
  %v816 = vmul.f32 %v774, 0.03125
  %v817 = vmul.f32 %v777, 0.03125
  %v818 = vmul.f32 %v780, 0.03125
  %v819 = vmul.f32 %v783, 0.03125
  %v820 = vmul.f32 %v786, 0.03125
  %v821 = vmul.f32 %v789, 0.03125
  %v822 = vmul.f32 %v792, 0.03125
  %v823 = vmul.f32 %v795, 0.03125
  %v824 = vmul.f32 %v798, 0.03125
  %v825 = vmul.f32 %v801, 0.03125
  %v826 = vmul.f32 %v804, 0.03125
  %v827 = vmul.f32 %v808, 0.03125
  %v828 = vmul.f32 %v537, %v537
  %v829 = vmul.f32 %v540, %v540
  %v830 = vmul.f32 %v543, %v543
  %v831 = vmul.f32 %v546, %v546
  %v832 = vmul.f32 %v549, %v549
  %v833 = vmul.f32 %v552, %v552
  %v834 = vmul.f32 %v555, %v555
  %v835 = vmul.f32 %v558, %v558
  %v836 = vmul.f32 %v561, %v561
  %v837 = vmul.f32 %v564, %v564
  %v838 = vmul.f32 %v567, %v567
  %v839 = vmul.f32 %v570, %v570
  %v840 = vmul.f32 %v573, %v573
  %v841 = vmul.f32 %v576, %v576
  %v842 = vmul.f32 %v579, %v579
  %v843 = vmul.f32 %v582, %v582
  %v844 = vmul.f32 %v585, %v585
  %v845 = vmul.f32 %v588, %v588
  %v846 = vmul.f32 %v591, %v591
  %v847 = vsel %vm750, %v828, 0.0
  %848 = vadd.xlane.f32.xlu0 %v847
  %v849 = vpop.xlane.xlu0 %848
  %v850 = vsel %vm750, %v829, 0.0
  %851 = vadd.xlane.f32.xlu0 %v850
  %v852 = vpop.xlane.xlu0 %851
  %v853 = vsel %vm750, %v830, 0.0
  %854 = vadd.xlane.f32.xlu0 %v853
  %v855 = vpop.xlane.xlu0 %854
  %v856 = vsel %vm750, %v831, 0.0
  %857 = vadd.xlane.f32.xlu0 %v856
  %v858 = vpop.xlane.xlu0 %857
  %v859 = vsel %vm750, %v832, 0.0
  %860 = vadd.xlane.f32.xlu0 %v859
  %v861 = vpop.xlane.xlu0 %860
  %v862 = vsel %vm750, %v833, 0.0
  %863 = vadd.xlane.f32.xlu0 %v862
  %v864 = vpop.xlane.xlu0 %863
  %v865 = vsel %vm750, %v834, 0.0
  %866 = vadd.xlane.f32.xlu0 %v865
  %v867 = vpop.xlane.xlu0 %866
  %v868 = vsel %vm750, %v835, 0.0
  %869 = vadd.xlane.f32.xlu0 %v868
  %v870 = vpop.xlane.xlu0 %869
  %v871 = vsel %vm750, %v836, 0.0
  %872 = vadd.xlane.f32.xlu0 %v871
  %v873 = vpop.xlane.xlu0 %872
  %v874 = vsel %vm750, %v837, 0.0
  %875 = vadd.xlane.f32.xlu0 %v874
  %v876 = vpop.xlane.xlu0 %875
  %v877 = vsel %vm750, %v838, 0.0
  %878 = vadd.xlane.f32.xlu0 %v877
  %v879 = vpop.xlane.xlu0 %878
  %v880 = vsel %vm750, %v839, 0.0
  %881 = vadd.xlane.f32.xlu0 %v880
  %v882 = vpop.xlane.xlu0 %881
  %v883 = vsel %vm750, %v840, 0.0
  %884 = vadd.xlane.f32.xlu0 %v883
  %v885 = vpop.xlane.xlu0 %884
  %v886 = vsel %vm750, %v841, 0.0
  %887 = vadd.xlane.f32.xlu0 %v886
  %v888 = vpop.xlane.xlu0 %887
  %v889 = vsel %vm750, %v842, 0.0
  %890 = vadd.xlane.f32.xlu0 %v889
  %v891 = vpop.xlane.xlu0 %890
  %v892 = vsel %vm750, %v843, 0.0
  %893 = vadd.xlane.f32.xlu0 %v892
  %v894 = vpop.xlane.xlu0 %893
  %v895 = vsel %vm750, %v844, 0.0
  %896 = vadd.xlane.f32.xlu0 %v895
  %v897 = vpop.xlane.xlu0 %896
  %v898 = vsel %vm750, %v845, 0.0
  %899 = vadd.xlane.f32.xlu0 %v898
  %v900 = vpop.xlane.xlu0 %899
  %v901 = vsel %vm805, %v846, 0.0
  %902 = vadd.xlane.f32.xlu0 %v901
  %v903 = vpop.xlane.xlu0 %902
  %v904 = vmul.f32 %v849, 0.03125
  %v905 = vmul.f32 %v852, 0.03125
  %v906 = vmul.f32 %v855, 0.03125
  %v907 = vmul.f32 %v858, 0.03125
  %v908 = vmul.f32 %v861, 0.03125
  %v909 = vmul.f32 %v864, 0.03125
  %v910 = vmul.f32 %v867, 0.03125
  %v911 = vmul.f32 %v870, 0.03125
  %v912 = vmul.f32 %v873, 0.03125
  %v913 = vmul.f32 %v876, 0.03125
  %v914 = vmul.f32 %v879, 0.03125
  %v915 = vmul.f32 %v882, 0.03125
  %v916 = vmul.f32 %v885, 0.03125
  %v917 = vmul.f32 %v888, 0.03125
  %v918 = vmul.f32 %v891, 0.03125
  %v919 = vmul.f32 %v894, 0.03125
  %v920 = vmul.f32 %v897, 0.03125
  %v921 = vmul.f32 %v900, 0.03125
  %v922 = vmul.f32 %v903, 0.03125
  %v923 = vmul.f32 %v809, %v809
  %v924 = vmul.f32 %v810, %v810
  %v925 = vmul.f32 %v811, %v811
  %v926 = vmul.f32 %v812, %v812
  %v927 = vmul.f32 %v813, %v813
  %v928 = vmul.f32 %v814, %v814
  %v929 = vmul.f32 %v815, %v815
  %v930 = vmul.f32 %v816, %v816
  %v931 = vmul.f32 %v817, %v817
  %v932 = vmul.f32 %v818, %v818
  %v933 = vmul.f32 %v819, %v819
  %v934 = vmul.f32 %v820, %v820
  %v935 = vmul.f32 %v821, %v821
  %v936 = vmul.f32 %v822, %v822
  %v937 = vmul.f32 %v823, %v823
  %v938 = vmul.f32 %v824, %v824
  %v939 = vmul.f32 %v825, %v825
  %v940 = vmul.f32 %v826, %v826
  %v941 = vmul.f32 %v827, %v827
  %v942 = vsub.f32 %v904, %v923
  %v943 = vsub.f32 %v905, %v924
  %v944 = vsub.f32 %v906, %v925
  %v945 = vsub.f32 %v907, %v926
  %v946 = vsub.f32 %v908, %v927
  %v947 = vsub.f32 %v909, %v928
  %v948 = vsub.f32 %v910, %v929
  %v949 = vsub.f32 %v911, %v930
  %v950 = vsub.f32 %v912, %v931
  %v951 = vsub.f32 %v913, %v932
  %v952 = vsub.f32 %v914, %v933
  %v953 = vsub.f32 %v915, %v934
  %v954 = vsub.f32 %v916, %v935
  %v955 = vsub.f32 %v917, %v936
  %v956 = vsub.f32 %v918, %v937
  %v957 = vsub.f32 %v919, %v938
  %v958 = vsub.f32 %v920, %v939
  %v959 = vsub.f32 %v921, %v940
  %v960 = vsub.f32 %v922, %v941
  %v961 = vmax.f32 %v942, 0.0
  %v962 = vmax.f32 %v943, 0.0
  %v963 = vmax.f32 %v944, 0.0
  %v964 = vmax.f32 %v945, 0.0
  %v965 = vmax.f32 %v946, 0.0
  %v966 = vmax.f32 %v947, 0.0
  %v967 = vmax.f32 %v948, 0.0
  %v968 = vmax.f32 %v949, 0.0
  %v969 = vmax.f32 %v950, 0.0
  %v970 = vmax.f32 %v951, 0.0
  %v971 = vmax.f32 %v952, 0.0
  %v972 = vmax.f32 %v953, 0.0
  %v973 = vmax.f32 %v954, 0.0
  %v974 = vmax.f32 %v955, 0.0
  %v975 = vmax.f32 %v956, 0.0
  %v976 = vmax.f32 %v957, 0.0
  %v977 = vmax.f32 %v958, 0.0
  %v978 = vmax.f32 %v959, 0.0
  %v979 = vmax.f32 %v960, 0.0
  %v980 = vsub.f32 %v537, %v809
  %v981 = vsub.f32 %v540, %v810
  %v982 = vsub.f32 %v543, %v811
  %v983 = vsub.f32 %v546, %v812
  %v984 = vsub.f32 %v549, %v813
  %v985 = vsub.f32 %v552, %v814
  %v986 = vsub.f32 %v555, %v815
  %v987 = vsub.f32 %v558, %v816
  %v988 = vsub.f32 %v561, %v817
  %v989 = vsub.f32 %v564, %v818
  %v990 = vsub.f32 %v567, %v819
  %v991 = vsub.f32 %v570, %v820
  %v992 = vsub.f32 %v573, %v821
  %v993 = vsub.f32 %v576, %v822
  %v994 = vsub.f32 %v579, %v823
  %v995 = vsub.f32 %v582, %v824
  %v996 = vsub.f32 %v585, %v825
  %v997 = vsub.f32 %v588, %v826
  %v998 = vsub.f32 %v591, %v827
  %v999 = vadd.f32 %v961, 1e-12
  %v1000 = vadd.f32 %v962, 1e-12
  %v1001 = vadd.f32 %v963, 1e-12
  %v1002 = vadd.f32 %v964, 1e-12
  %v1003 = vadd.f32 %v965, 1e-12
  %v1004 = vadd.f32 %v966, 1e-12
  %v1005 = vadd.f32 %v967, 1e-12
  %v1006 = vadd.f32 %v968, 1e-12
  %v1007 = vadd.f32 %v969, 1e-12
  %v1008 = vadd.f32 %v970, 1e-12
  %v1009 = vadd.f32 %v971, 1e-12
  %v1010 = vadd.f32 %v972, 1e-12
  %v1011 = vadd.f32 %v973, 1e-12
  %v1012 = vadd.f32 %v974, 1e-12
  %v1013 = vadd.f32 %v975, 1e-12
  %v1014 = vadd.f32 %v976, 1e-12
  %v1015 = vadd.f32 %v977, 1e-12
  %v1016 = vadd.f32 %v978, 1e-12
  %v1017 = vadd.f32 %v979, 1e-12
  %v1018 = vrsqrt.pop %v999
  %v1019 = vmul.f32 %v1018, %v999
  %v1020 = vmul.f32 %v1019, %v1018
  %v1021 = vmul.f32 0.5, %v1020
  %v1022 = vsub.f32 1.5, %v1021
  %v1023 = vmul.f32 %v1018, %v1022
  %vm1024 = vweird.f32 %v999
  %vm1025 = vweird.f32 %v1018
  %vm1026 = vmor %vm1024, %vm1025
  %v1027 = vsel %vm1026, %v1018, %v1023
  %v1028 = vrsqrt.pop %v1000
  %v1029 = vmul.f32 %v1028, %v1000
  %v1030 = vmul.f32 %v1029, %v1028
  %v1031 = vmul.f32 0.5, %v1030
  %v1032 = vsub.f32 1.5, %v1031
  %v1033 = vmul.f32 %v1028, %v1032
  %vm1034 = vweird.f32 %v1000
  %vm1035 = vweird.f32 %v1028
  %vm1036 = vmor %vm1034, %vm1035
  %v1037 = vsel %vm1036, %v1028, %v1033
  %v1038 = vrsqrt.pop %v1001
  %v1039 = vmul.f32 %v1038, %v1001
  %v1040 = vmul.f32 %v1039, %v1038
  %v1041 = vmul.f32 0.5, %v1040
  %v1042 = vsub.f32 1.5, %v1041
  %v1043 = vmul.f32 %v1038, %v1042
  %vm1044 = vweird.f32 %v1001
  %vm1045 = vweird.f32 %v1038
  %vm1046 = vmor %vm1044, %vm1045
  %v1047 = vsel %vm1046, %v1038, %v1043
  %v1048 = vrsqrt.pop %v1002
  %v1049 = vmul.f32 %v1048, %v1002
  %v1050 = vmul.f32 %v1049, %v1048
  %v1051 = vmul.f32 0.5, %v1050
  %v1052 = vsub.f32 1.5, %v1051
  %v1053 = vmul.f32 %v1048, %v1052
  %vm1054 = vweird.f32 %v1002
  %vm1055 = vweird.f32 %v1048
  %vm1056 = vmor %vm1054, %vm1055
  %v1057 = vsel %vm1056, %v1048, %v1053
  %v1058 = vrsqrt.pop %v1003
  %v1059 = vmul.f32 %v1058, %v1003
  %v1060 = vmul.f32 %v1059, %v1058
  %v1061 = vmul.f32 0.5, %v1060
  %v1062 = vsub.f32 1.5, %v1061
  %v1063 = vmul.f32 %v1058, %v1062
  %vm1064 = vweird.f32 %v1003
  %vm1065 = vweird.f32 %v1058
  %vm1066 = vmor %vm1064, %vm1065
  %v1067 = vsel %vm1066, %v1058, %v1063
  %v1068 = vrsqrt.pop %v1004
  %v1069 = vmul.f32 %v1068, %v1004
  %v1070 = vmul.f32 %v1069, %v1068
  %v1071 = vmul.f32 0.5, %v1070
  %v1072 = vsub.f32 1.5, %v1071
  %v1073 = vmul.f32 %v1068, %v1072
  %vm1074 = vweird.f32 %v1004
  %vm1075 = vweird.f32 %v1068
  %vm1076 = vmor %vm1074, %vm1075
  %v1077 = vsel %vm1076, %v1068, %v1073
  %v1078 = vrsqrt.pop %v1005
  %v1079 = vmul.f32 %v1078, %v1005
  %v1080 = vmul.f32 %v1079, %v1078
  %v1081 = vmul.f32 0.5, %v1080
  %v1082 = vsub.f32 1.5, %v1081
  %v1083 = vmul.f32 %v1078, %v1082
  %vm1084 = vweird.f32 %v1005
  %vm1085 = vweird.f32 %v1078
  %vm1086 = vmor %vm1084, %vm1085
  %v1087 = vsel %vm1086, %v1078, %v1083
  %v1088 = vrsqrt.pop %v1006
  %v1089 = vmul.f32 %v1088, %v1006
  %v1090 = vmul.f32 %v1089, %v1088
  %v1091 = vmul.f32 0.5, %v1090
  %v1092 = vsub.f32 1.5, %v1091
  %v1093 = vmul.f32 %v1088, %v1092
  %vm1094 = vweird.f32 %v1006
  %vm1095 = vweird.f32 %v1088
  %vm1096 = vmor %vm1094, %vm1095
  %v1097 = vsel %vm1096, %v1088, %v1093
  %v1098 = vrsqrt.pop %v1007
  %v1099 = vmul.f32 %v1098, %v1007
  %v1100 = vmul.f32 %v1099, %v1098
  %v1101 = vmul.f32 0.5, %v1100
  %v1102 = vsub.f32 1.5, %v1101
  %v1103 = vmul.f32 %v1098, %v1102
  %vm1104 = vweird.f32 %v1007
  %vm1105 = vweird.f32 %v1098
  %vm1106 = vmor %vm1104, %vm1105
  %v1107 = vsel %vm1106, %v1098, %v1103
  %v1108 = vrsqrt.pop %v1008
  %v1109 = vmul.f32 %v1108, %v1008
  %v1110 = vmul.f32 %v1109, %v1108
  %v1111 = vmul.f32 0.5, %v1110
  %v1112 = vsub.f32 1.5, %v1111
  %v1113 = vmul.f32 %v1108, %v1112
  %vm1114 = vweird.f32 %v1008
  %vm1115 = vweird.f32 %v1108
  %vm1116 = vmor %vm1114, %vm1115
  %v1117 = vsel %vm1116, %v1108, %v1113
  %v1118 = vrsqrt.pop %v1009
  %v1119 = vmul.f32 %v1118, %v1009
  %v1120 = vmul.f32 %v1119, %v1118
  %v1121 = vmul.f32 0.5, %v1120
  %v1122 = vsub.f32 1.5, %v1121
  %v1123 = vmul.f32 %v1118, %v1122
  %vm1124 = vweird.f32 %v1009
  %vm1125 = vweird.f32 %v1118
  %vm1126 = vmor %vm1124, %vm1125
  %v1127 = vsel %vm1126, %v1118, %v1123
  %v1128 = vrsqrt.pop %v1010
  %v1129 = vmul.f32 %v1128, %v1010
  %v1130 = vmul.f32 %v1129, %v1128
  %v1131 = vmul.f32 0.5, %v1130
  %v1132 = vsub.f32 1.5, %v1131
  %v1133 = vmul.f32 %v1128, %v1132
  %vm1134 = vweird.f32 %v1010
  %vm1135 = vweird.f32 %v1128
  %vm1136 = vmor %vm1134, %vm1135
  %v1137 = vsel %vm1136, %v1128, %v1133
  %v1138 = vrsqrt.pop %v1011
  %v1139 = vmul.f32 %v1138, %v1011
  %v1140 = vmul.f32 %v1139, %v1138
  %v1141 = vmul.f32 0.5, %v1140
  %v1142 = vsub.f32 1.5, %v1141
  %v1143 = vmul.f32 %v1138, %v1142
  %vm1144 = vweird.f32 %v1011
  %vm1145 = vweird.f32 %v1138
  %vm1146 = vmor %vm1144, %vm1145
  %v1147 = vsel %vm1146, %v1138, %v1143
  %v1148 = vrsqrt.pop %v1012
  %v1149 = vmul.f32 %v1148, %v1012
  %v1150 = vmul.f32 %v1149, %v1148
  %v1151 = vmul.f32 0.5, %v1150
  %v1152 = vsub.f32 1.5, %v1151
  %v1153 = vmul.f32 %v1148, %v1152
  %vm1154 = vweird.f32 %v1012
  %vm1155 = vweird.f32 %v1148
  %vm1156 = vmor %vm1154, %vm1155
  %v1157 = vsel %vm1156, %v1148, %v1153
  %v1158 = vrsqrt.pop %v1013
  %v1159 = vmul.f32 %v1158, %v1013
  %v1160 = vmul.f32 %v1159, %v1158
  %v1161 = vmul.f32 0.5, %v1160
  %v1162 = vsub.f32 1.5, %v1161
  %v1163 = vmul.f32 %v1158, %v1162
  %vm1164 = vweird.f32 %v1013
  %vm1165 = vweird.f32 %v1158
  %vm1166 = vmor %vm1164, %vm1165
  %v1167 = vsel %vm1166, %v1158, %v1163
  %v1168 = vrsqrt.pop %v1014
  %v1169 = vmul.f32 %v1168, %v1014
  %v1170 = vmul.f32 %v1169, %v1168
  %v1171 = vmul.f32 0.5, %v1170
  %v1172 = vsub.f32 1.5, %v1171
  %v1173 = vmul.f32 %v1168, %v1172
  %vm1174 = vweird.f32 %v1014
  %vm1175 = vweird.f32 %v1168
  %vm1176 = vmor %vm1174, %vm1175
  %v1177 = vsel %vm1176, %v1168, %v1173
  %v1178 = vrsqrt.pop %v1015
  %v1179 = vmul.f32 %v1178, %v1015
  %v1180 = vmul.f32 %v1179, %v1178
  %v1181 = vmul.f32 0.5, %v1180
  %v1182 = vsub.f32 1.5, %v1181
  %v1183 = vmul.f32 %v1178, %v1182
  %vm1184 = vweird.f32 %v1015
  %vm1185 = vweird.f32 %v1178
  %vm1186 = vmor %vm1184, %vm1185
  %v1187 = vsel %vm1186, %v1178, %v1183
  %v1188 = vrsqrt.pop %v1016
  %v1189 = vmul.f32 %v1188, %v1016
  %v1190 = vmul.f32 %v1189, %v1188
  %v1191 = vmul.f32 0.5, %v1190
  %v1192 = vsub.f32 1.5, %v1191
  %v1193 = vmul.f32 %v1188, %v1192
  %vm1194 = vweird.f32 %v1016
  %vm1195 = vweird.f32 %v1188
  %vm1196 = vmor %vm1194, %vm1195
  %v1197 = vsel %vm1196, %v1188, %v1193
  %v1198 = vrsqrt.pop %v1017
  %v1199 = vmul.f32 %v1198, %v1017
  %v1200 = vmul.f32 %v1199, %v1198
  %v1201 = vmul.f32 0.5, %v1200
  %v1202 = vsub.f32 1.5, %v1201
  %v1203 = vmul.f32 %v1198, %v1202
  %vm1204 = vweird.f32 %v1017
  %vm1205 = vweird.f32 %v1198
  %vm1206 = vmor %vm1204, %vm1205
  %v1207 = vsel %vm1206, %v1198, %v1203
  %v1208 = vmul.f32 %v980, %v1027
  %v1209 = vmul.f32 %v981, %v1037
  %v1210 = vmul.f32 %v982, %v1047
  %v1211 = vmul.f32 %v983, %v1057
  %v1212 = vmul.f32 %v984, %v1067
  %v1213 = vmul.f32 %v985, %v1077
  %v1214 = vmul.f32 %v986, %v1087
  %v1215 = vmul.f32 %v987, %v1097
  %v1216 = vmul.f32 %v988, %v1107
  %v1217 = vmul.f32 %v989, %v1117
  %v1218 = vmul.f32 %v990, %v1127
  %v1219 = vmul.f32 %v991, %v1137
  %v1220 = vmul.f32 %v992, %v1147
  %v1221 = vmul.f32 %v993, %v1157
  %v1222 = vmul.f32 %v994, %v1167
  %v1223 = vmul.f32 %v995, %v1177
  %v1224 = vmul.f32 %v996, %v1187
  %v1225 = vmul.f32 %v997, %v1197
  %v1226 = vmul.f32 %v998, %v1207
  %v1227 = vperm.slane %v30, 2
  %v1228 = vmul.f32 %v1208, %v1227
  %v1229 = vmul.f32 %v1209, %v1227
  %v1230 = vmul.f32 %v1210, %v1227
  %v1231 = vmul.f32 %v1211, %v1227
  %v1232 = vmul.f32 %v1212, %v1227
  %v1233 = vmul.f32 %v1213, %v1227
  %v1234 = vmul.f32 %v1214, %v1227
  %v1235 = vmul.f32 %v1215, %v1227
  %v1236 = vmul.f32 %v1216, %v1227
  %v1237 = vmul.f32 %v1217, %v1227
  %v1238 = vmul.f32 %v1218, %v1227
  %v1239 = vmul.f32 %v1219, %v1227
  %v1240 = vmul.f32 %v1220, %v1227
  %v1241 = vmul.f32 %v1221, %v1227
  %v1242 = vmul.f32 %v1222, %v1227
  %v1243 = vmul.f32 %v1223, %v1227
  %v1244 = vmul.f32 %v1224, %v1227
  %v1245 = vmul.f32 %v1225, %v1227
  %v1246 = vmul.f32 %v1226, %v1227
  %v1247 = vperm.slane %v30, 3
  %v1248 = vadd.f32 %v1228, %v1247
  %v1249 = vadd.f32 %v1229, %v1247
  %v1250 = vadd.f32 %v1230, %v1247
  %v1251 = vadd.f32 %v1231, %v1247
  %v1252 = vadd.f32 %v1232, %v1247
  %v1253 = vadd.f32 %v1233, %v1247
  %v1254 = vadd.f32 %v1234, %v1247
  %v1255 = vadd.f32 %v1235, %v1247
  %v1256 = vadd.f32 %v1236, %v1247
  %v1257 = vadd.f32 %v1237, %v1247
  %v1258 = vadd.f32 %v1238, %v1247
  %v1259 = vadd.f32 %v1239, %v1247
  %v1260 = vadd.f32 %v1240, %v1247
  %v1261 = vadd.f32 %v1241, %v1247
  %v1262 = vadd.f32 %v1242, %v1247
  %v1263 = vadd.f32 %v1243, %v1247
  %v1264 = vadd.f32 %v1244, %v1247
  %v1265 = vadd.f32 %v1245, %v1247
  %v1266 = vadd.f32 %v1246, %v1247
  %v1267 = vsel %vm750, %v694, 0.0
  %1268 = vadd.xlane.f32.xlu0 %v1267
  %v1269 = vpop.xlane.xlu0 %1268
  %v1270 = vsel %vm750, %v697, 0.0
  %1271 = vadd.xlane.f32.xlu0 %v1270
  %v1272 = vpop.xlane.xlu0 %1271
  %v1273 = vsel %vm750, %v700, 0.0
  %1274 = vadd.xlane.f32.xlu0 %v1273
  %v1275 = vpop.xlane.xlu0 %1274
  %v1276 = vsel %vm750, %v703, 0.0
  %1277 = vadd.xlane.f32.xlu0 %v1276
  %v1278 = vpop.xlane.xlu0 %1277
  %v1279 = vsel %vm750, %v706, 0.0
  %1280 = vadd.xlane.f32.xlu0 %v1279
  %v1281 = vpop.xlane.xlu0 %1280
  %v1282 = vsel %vm750, %v709, 0.0
  %1283 = vadd.xlane.f32.xlu0 %v1282
  %v1284 = vpop.xlane.xlu0 %1283
  %v1285 = vsel %vm750, %v712, 0.0
  %1286 = vadd.xlane.f32.xlu0 %v1285
  %v1287 = vpop.xlane.xlu0 %1286
  %v1288 = vsel %vm750, %v715, 0.0
  %1289 = vadd.xlane.f32.xlu0 %v1288
  %v1290 = vpop.xlane.xlu0 %1289
  %v1291 = vsel %vm750, %v718, 0.0
  %1292 = vadd.xlane.f32.xlu0 %v1291
  %v1293 = vpop.xlane.xlu0 %1292
  %v1294 = vsel %vm750, %v721, 0.0
  %1295 = vadd.xlane.f32.xlu0 %v1294
  %v1296 = vpop.xlane.xlu0 %1295
  %v1297 = vsel %vm750, %v724, 0.0
  %1298 = vadd.xlane.f32.xlu0 %v1297
  %v1299 = vpop.xlane.xlu0 %1298
  %v1300 = vsel %vm750, %v727, 0.0
  %1301 = vadd.xlane.f32.xlu0 %v1300
  %v1302 = vpop.xlane.xlu0 %1301
  %v1303 = vsel %vm750, %v730, 0.0
  %1304 = vadd.xlane.f32.xlu0 %v1303
  %v1305 = vpop.xlane.xlu0 %1304
  %v1306 = vsel %vm750, %v733, 0.0
  %1307 = vadd.xlane.f32.xlu0 %v1306
  %v1308 = vpop.xlane.xlu0 %1307
  %v1309 = vsel %vm750, %v736, 0.0
  %1310 = vadd.xlane.f32.xlu0 %v1309
  %v1311 = vpop.xlane.xlu0 %1310
  %v1312 = vsel %vm750, %v739, 0.0
  %1313 = vadd.xlane.f32.xlu0 %v1312
  %v1314 = vpop.xlane.xlu0 %1313
  %v1315 = vsel %vm750, %v742, 0.0
  %1316 = vadd.xlane.f32.xlu0 %v1315
  %v1317 = vpop.xlane.xlu0 %1316
  %v1318 = vsel %vm750, %v745, 0.0
  %1319 = vadd.xlane.f32.xlu0 %v1318
  %v1320 = vpop.xlane.xlu0 %1319
  %v1321 = vsel %vm805, %v748, 0.0
  %1322 = vadd.xlane.f32.xlu0 %v1321
  %v1323 = vpop.xlane.xlu0 %1322
  %v1324 = vmul.f32 %v1269, 0.03125
  %v1325 = vmul.f32 %v1272, 0.03125
  %v1326 = vmul.f32 %v1275, 0.03125
  %v1327 = vmul.f32 %v1278, 0.03125
  %v1328 = vmul.f32 %v1281, 0.03125
  %v1329 = vmul.f32 %v1284, 0.03125
  %v1330 = vmul.f32 %v1287, 0.03125
  %v1331 = vmul.f32 %v1290, 0.03125
  %v1332 = vmul.f32 %v1293, 0.03125
  %v1333 = vmul.f32 %v1296, 0.03125
  %v1334 = vmul.f32 %v1299, 0.03125
  %v1335 = vmul.f32 %v1302, 0.03125
  %v1336 = vmul.f32 %v1305, 0.03125
  %v1337 = vmul.f32 %v1308, 0.03125
  %v1338 = vmul.f32 %v1311, 0.03125
  %v1339 = vmul.f32 %v1314, 0.03125
  %v1340 = vmul.f32 %v1317, 0.03125
  %v1341 = vmul.f32 %v1320, 0.03125
  %v1342 = vmul.f32 %v1323, 0.03125
  %v1343 = vmul.f32 %v694, %v694
  %v1344 = vmul.f32 %v697, %v697
  %v1345 = vmul.f32 %v700, %v700
  %v1346 = vmul.f32 %v703, %v703
  %v1347 = vmul.f32 %v706, %v706
  %v1348 = vmul.f32 %v709, %v709
  %v1349 = vmul.f32 %v712, %v712
  %v1350 = vmul.f32 %v715, %v715
  %v1351 = vmul.f32 %v718, %v718
  %v1352 = vmul.f32 %v721, %v721
  %v1353 = vmul.f32 %v724, %v724
  %v1354 = vmul.f32 %v727, %v727
  %v1355 = vmul.f32 %v730, %v730
  %v1356 = vmul.f32 %v733, %v733
  %v1357 = vmul.f32 %v736, %v736
  %v1358 = vmul.f32 %v739, %v739
  %v1359 = vmul.f32 %v742, %v742
  %v1360 = vmul.f32 %v745, %v745
  %v1361 = vmul.f32 %v748, %v748
  %v1362 = vsel %vm750, %v1343, 0.0
  %1363 = vadd.xlane.f32.xlu0 %v1362
  %v1364 = vpop.xlane.xlu0 %1363
  %v1365 = vsel %vm750, %v1344, 0.0
  %1366 = vadd.xlane.f32.xlu0 %v1365
  %v1367 = vpop.xlane.xlu0 %1366
  %v1368 = vsel %vm750, %v1345, 0.0
  %1369 = vadd.xlane.f32.xlu0 %v1368
  %v1370 = vpop.xlane.xlu0 %1369
  %v1371 = vsel %vm750, %v1346, 0.0
  %1372 = vadd.xlane.f32.xlu0 %v1371
  %v1373 = vpop.xlane.xlu0 %1372
  %v1374 = vsel %vm750, %v1347, 0.0
  %1375 = vadd.xlane.f32.xlu0 %v1374
  %v1376 = vpop.xlane.xlu0 %1375
  %v1377 = vsel %vm750, %v1348, 0.0
  %1378 = vadd.xlane.f32.xlu0 %v1377
  %v1379 = vpop.xlane.xlu0 %1378
  %v1380 = vsel %vm750, %v1349, 0.0
  %1381 = vadd.xlane.f32.xlu0 %v1380
  %v1382 = vpop.xlane.xlu0 %1381
  %v1383 = vsel %vm750, %v1350, 0.0
  %1384 = vadd.xlane.f32.xlu0 %v1383
  %v1385 = vpop.xlane.xlu0 %1384
  %v1386 = vsel %vm750, %v1351, 0.0
  %1387 = vadd.xlane.f32.xlu0 %v1386
  %v1388 = vpop.xlane.xlu0 %1387
  %v1389 = vsel %vm750, %v1352, 0.0
  %1390 = vadd.xlane.f32.xlu0 %v1389
  %v1391 = vpop.xlane.xlu0 %1390
  %v1392 = vsel %vm750, %v1353, 0.0
  %1393 = vadd.xlane.f32.xlu0 %v1392
  %v1394 = vpop.xlane.xlu0 %1393
  %v1395 = vsel %vm750, %v1354, 0.0
  %1396 = vadd.xlane.f32.xlu0 %v1395
  %v1397 = vpop.xlane.xlu0 %1396
  %v1398 = vsel %vm750, %v1355, 0.0
  %1399 = vadd.xlane.f32.xlu0 %v1398
  %v1400 = vpop.xlane.xlu0 %1399
  %v1401 = vsel %vm750, %v1356, 0.0
  %1402 = vadd.xlane.f32.xlu0 %v1401
  %v1403 = vpop.xlane.xlu0 %1402
  %v1404 = vsel %vm750, %v1357, 0.0
  %1405 = vadd.xlane.f32.xlu0 %v1404
  %v1406 = vpop.xlane.xlu0 %1405
  %v1407 = vsel %vm750, %v1358, 0.0
  %1408 = vadd.xlane.f32.xlu0 %v1407
  %v1409 = vpop.xlane.xlu0 %1408
  %v1410 = vsel %vm750, %v1359, 0.0
  %1411 = vadd.xlane.f32.xlu0 %v1410
  %v1412 = vpop.xlane.xlu0 %1411
  %v1413 = vsel %vm750, %v1360, 0.0
  %1414 = vadd.xlane.f32.xlu0 %v1413
  %v1415 = vpop.xlane.xlu0 %1414
  %v1416 = vsel %vm805, %v1361, 0.0
  %1417 = vadd.xlane.f32.xlu0 %v1416
  %v1418 = vpop.xlane.xlu0 %1417
  %v1419 = vmul.f32 %v1364, 0.03125
  %v1420 = vmul.f32 %v1367, 0.03125
  %v1421 = vmul.f32 %v1370, 0.03125
  %v1422 = vmul.f32 %v1373, 0.03125
  %v1423 = vmul.f32 %v1376, 0.03125
  %v1424 = vmul.f32 %v1379, 0.03125
  %v1425 = vmul.f32 %v1382, 0.03125
  %v1426 = vmul.f32 %v1385, 0.03125
  %v1427 = vmul.f32 %v1388, 0.03125
  %v1428 = vmul.f32 %v1391, 0.03125
  %v1429 = vmul.f32 %v1394, 0.03125
  %v1430 = vmul.f32 %v1397, 0.03125
  %v1431 = vmul.f32 %v1400, 0.03125
  %v1432 = vmul.f32 %v1403, 0.03125
  %v1433 = vmul.f32 %v1406, 0.03125
  %v1434 = vmul.f32 %v1409, 0.03125
  %v1435 = vmul.f32 %v1412, 0.03125
  %v1436 = vmul.f32 %v1415, 0.03125
  %v1437 = vmul.f32 %v1418, 0.03125
  %v1438 = vmul.f32 %v1324, %v1324
  %v1439 = vmul.f32 %v1325, %v1325
  %v1440 = vmul.f32 %v1326, %v1326
  %v1441 = vmul.f32 %v1327, %v1327
  %v1442 = vmul.f32 %v1328, %v1328
  %v1443 = vmul.f32 %v1329, %v1329
  %v1444 = vmul.f32 %v1330, %v1330
  %v1445 = vmul.f32 %v1331, %v1331
  %v1446 = vmul.f32 %v1332, %v1332
  %v1447 = vmul.f32 %v1333, %v1333
  %v1448 = vmul.f32 %v1334, %v1334
  %v1449 = vmul.f32 %v1335, %v1335
  %v1450 = vmul.f32 %v1336, %v1336
  %v1451 = vmul.f32 %v1337, %v1337
  %v1452 = vmul.f32 %v1338, %v1338
  %v1453 = vmul.f32 %v1339, %v1339
  %v1454 = vmul.f32 %v1340, %v1340
  %v1455 = vmul.f32 %v1341, %v1341
  %v1456 = vmul.f32 %v1342, %v1342
  %v1457 = vsub.f32 %v1419, %v1438
  %v1458 = vsub.f32 %v1420, %v1439
  %v1459 = vsub.f32 %v1421, %v1440
  %v1460 = vsub.f32 %v1422, %v1441
  %v1461 = vsub.f32 %v1423, %v1442
  %v1462 = vsub.f32 %v1424, %v1443
  %v1463 = vsub.f32 %v1425, %v1444
  %v1464 = vsub.f32 %v1426, %v1445
  %v1465 = vsub.f32 %v1427, %v1446
  %v1466 = vsub.f32 %v1428, %v1447
  %v1467 = vsub.f32 %v1429, %v1448
  %v1468 = vsub.f32 %v1430, %v1449
  %v1469 = vsub.f32 %v1431, %v1450
  %v1470 = vsub.f32 %v1432, %v1451
  %v1471 = vsub.f32 %v1433, %v1452
  %v1472 = vsub.f32 %v1434, %v1453
  %v1473 = vsub.f32 %v1435, %v1454
  %v1474 = vsub.f32 %v1436, %v1455
  %v1475 = vsub.f32 %v1437, %v1456
  %v1476 = vmax.f32 %v1457, 0.0
  %v1477 = vmax.f32 %v1458, 0.0
  %v1478 = vmax.f32 %v1459, 0.0
  %v1479 = vmax.f32 %v1460, 0.0
  %v1480 = vmax.f32 %v1461, 0.0
  %v1481 = vmax.f32 %v1462, 0.0
  %v1482 = vmax.f32 %v1463, 0.0
  %v1483 = vmax.f32 %v1464, 0.0
  %v1484 = vmax.f32 %v1465, 0.0
  %v1485 = vmax.f32 %v1466, 0.0
  %v1486 = vmax.f32 %v1467, 0.0
  %v1487 = vmax.f32 %v1468, 0.0
  %v1488 = vmax.f32 %v1469, 0.0
  %v1489 = vmax.f32 %v1470, 0.0
  %v1490 = vmax.f32 %v1471, 0.0
  %v1491 = vmax.f32 %v1472, 0.0
  %v1492 = vmax.f32 %v1473, 0.0
  %v1493 = vmax.f32 %v1474, 0.0
  %v1494 = vmax.f32 %v1475, 0.0
  %v1495 = vsub.f32 %v694, %v1324
  %v1496 = vsub.f32 %v697, %v1325
  %v1497 = vsub.f32 %v700, %v1326
  %v1498 = vsub.f32 %v703, %v1327
  %v1499 = vsub.f32 %v706, %v1328
  %v1500 = vsub.f32 %v709, %v1329
  %v1501 = vsub.f32 %v712, %v1330
  %v1502 = vsub.f32 %v715, %v1331
  %v1503 = vsub.f32 %v718, %v1332
  %v1504 = vsub.f32 %v721, %v1333
  %v1505 = vsub.f32 %v724, %v1334
  %v1506 = vsub.f32 %v727, %v1335
  %v1507 = vsub.f32 %v730, %v1336
  %v1508 = vsub.f32 %v733, %v1337
  %v1509 = vsub.f32 %v736, %v1338
  %v1510 = vsub.f32 %v739, %v1339
  %v1511 = vsub.f32 %v742, %v1340
  %v1512 = vsub.f32 %v745, %v1341
  %v1513 = vsub.f32 %v748, %v1342
  %v1514 = vadd.f32 %v1476, 1e-12
  %v1515 = vadd.f32 %v1477, 1e-12
  %v1516 = vadd.f32 %v1478, 1e-12
  %v1517 = vadd.f32 %v1479, 1e-12
  %v1518 = vadd.f32 %v1480, 1e-12
  %v1519 = vadd.f32 %v1481, 1e-12
  %v1520 = vadd.f32 %v1482, 1e-12
  %v1521 = vadd.f32 %v1483, 1e-12
  %v1522 = vadd.f32 %v1484, 1e-12
  %v1523 = vadd.f32 %v1485, 1e-12
  %v1524 = vadd.f32 %v1486, 1e-12
  %v1525 = vadd.f32 %v1487, 1e-12
  %v1526 = vadd.f32 %v1488, 1e-12
  %v1527 = vadd.f32 %v1489, 1e-12
  %v1528 = vadd.f32 %v1490, 1e-12
  %v1529 = vadd.f32 %v1491, 1e-12
  %v1530 = vadd.f32 %v1492, 1e-12
  %v1531 = vadd.f32 %v1493, 1e-12
  %v1532 = vadd.f32 %v1494, 1e-12
  %v1533 = vrsqrt.pop %v1514
  %v1534 = vmul.f32 %v1533, %v1514
  %v1535 = vmul.f32 %v1534, %v1533
  %v1536 = vmul.f32 0.5, %v1535
  %v1537 = vsub.f32 1.5, %v1536
  %v1538 = vmul.f32 %v1533, %v1537
  %vm1539 = vweird.f32 %v1514
  %vm1540 = vweird.f32 %v1533
  %vm1541 = vmor %vm1539, %vm1540
  %v1542 = vsel %vm1541, %v1533, %v1538
  %v1543 = vrsqrt.pop %v1515
  %v1544 = vmul.f32 %v1543, %v1515
  %v1545 = vmul.f32 %v1544, %v1543
  %v1546 = vmul.f32 0.5, %v1545
  %v1547 = vsub.f32 1.5, %v1546
  %v1548 = vmul.f32 %v1543, %v1547
  %vm1549 = vweird.f32 %v1515
  %vm1550 = vweird.f32 %v1543
  %vm1551 = vmor %vm1549, %vm1550
  %v1552 = vsel %vm1551, %v1543, %v1548
  %v1553 = vrsqrt.pop %v1516
  %v1554 = vmul.f32 %v1553, %v1516
  %v1555 = vmul.f32 %v1554, %v1553
  %v1556 = vmul.f32 0.5, %v1555
  %v1557 = vsub.f32 1.5, %v1556
  %v1558 = vmul.f32 %v1553, %v1557
  %vm1559 = vweird.f32 %v1516
  %vm1560 = vweird.f32 %v1553
  %vm1561 = vmor %vm1559, %vm1560
  %v1562 = vsel %vm1561, %v1553, %v1558
  %v1563 = vrsqrt.pop %v1517
  %v1564 = vmul.f32 %v1563, %v1517
  %v1565 = vmul.f32 %v1564, %v1563
  %v1566 = vmul.f32 0.5, %v1565
  %v1567 = vsub.f32 1.5, %v1566
  %v1568 = vmul.f32 %v1563, %v1567
  %vm1569 = vweird.f32 %v1517
  %vm1570 = vweird.f32 %v1563
  %vm1571 = vmor %vm1569, %vm1570
  %v1572 = vsel %vm1571, %v1563, %v1568
  %v1573 = vrsqrt.pop %v1518
  %v1574 = vmul.f32 %v1573, %v1518
  %v1575 = vmul.f32 %v1574, %v1573
  %v1576 = vmul.f32 0.5, %v1575
  %v1577 = vsub.f32 1.5, %v1576
  %v1578 = vmul.f32 %v1573, %v1577
  %vm1579 = vweird.f32 %v1518
  %vm1580 = vweird.f32 %v1573
  %vm1581 = vmor %vm1579, %vm1580
  %v1582 = vsel %vm1581, %v1573, %v1578
  %v1583 = vrsqrt.pop %v1519
  %v1584 = vmul.f32 %v1583, %v1519
  %v1585 = vmul.f32 %v1584, %v1583
  %v1586 = vmul.f32 0.5, %v1585
  %v1587 = vsub.f32 1.5, %v1586
  %v1588 = vmul.f32 %v1583, %v1587
  %vm1589 = vweird.f32 %v1519
  %vm1590 = vweird.f32 %v1583
  %vm1591 = vmor %vm1589, %vm1590
  %v1592 = vsel %vm1591, %v1583, %v1588
  %v1593 = vrsqrt.pop %v1520
  %v1594 = vmul.f32 %v1593, %v1520
  %v1595 = vmul.f32 %v1594, %v1593
  %v1596 = vmul.f32 0.5, %v1595
  %v1597 = vsub.f32 1.5, %v1596
  %v1598 = vmul.f32 %v1593, %v1597
  %vm1599 = vweird.f32 %v1520
  %vm1600 = vweird.f32 %v1593
  %vm1601 = vmor %vm1599, %vm1600
  %v1602 = vsel %vm1601, %v1593, %v1598
  %v1603 = vrsqrt.pop %v1521
  %v1604 = vmul.f32 %v1603, %v1521
  %v1605 = vmul.f32 %v1604, %v1603
  %v1606 = vmul.f32 0.5, %v1605
  %v1607 = vsub.f32 1.5, %v1606
  %v1608 = vmul.f32 %v1603, %v1607
  %vm1609 = vweird.f32 %v1521
  %vm1610 = vweird.f32 %v1603
  %vm1611 = vmor %vm1609, %vm1610
  %v1612 = vsel %vm1611, %v1603, %v1608
  %v1613 = vrsqrt.pop %v1522
  %v1614 = vmul.f32 %v1613, %v1522
  %v1615 = vmul.f32 %v1614, %v1613
  %v1616 = vmul.f32 0.5, %v1615
  %v1617 = vsub.f32 1.5, %v1616
  %v1618 = vmul.f32 %v1613, %v1617
  %vm1619 = vweird.f32 %v1522
  %vm1620 = vweird.f32 %v1613
  %vm1621 = vmor %vm1619, %vm1620
  %v1622 = vsel %vm1621, %v1613, %v1618
  %v1623 = vrsqrt.pop %v1523
  %v1624 = vmul.f32 %v1623, %v1523
  %v1625 = vmul.f32 %v1624, %v1623
  %v1626 = vmul.f32 0.5, %v1625
  %v1627 = vsub.f32 1.5, %v1626
  %v1628 = vmul.f32 %v1623, %v1627
  %vm1629 = vweird.f32 %v1523
  %vm1630 = vweird.f32 %v1623
  %vm1631 = vmor %vm1629, %vm1630
  %v1632 = vsel %vm1631, %v1623, %v1628
  %v1633 = vrsqrt.pop %v1524
  %v1634 = vmul.f32 %v1633, %v1524
  %v1635 = vmul.f32 %v1634, %v1633
  %v1636 = vmul.f32 0.5, %v1635
  %v1637 = vsub.f32 1.5, %v1636
  %v1638 = vmul.f32 %v1633, %v1637
  %vm1639 = vweird.f32 %v1524
  %vm1640 = vweird.f32 %v1633
  %vm1641 = vmor %vm1639, %vm1640
  %v1642 = vsel %vm1641, %v1633, %v1638
  %v1643 = vrsqrt.pop %v1525
  %v1644 = vmul.f32 %v1643, %v1525
  %v1645 = vmul.f32 %v1644, %v1643
  %v1646 = vmul.f32 0.5, %v1645
  %v1647 = vsub.f32 1.5, %v1646
  %v1648 = vmul.f32 %v1643, %v1647
  %vm1649 = vweird.f32 %v1525
  %vm1650 = vweird.f32 %v1643
  %vm1651 = vmor %vm1649, %vm1650
  %v1652 = vsel %vm1651, %v1643, %v1648
  %v1653 = vrsqrt.pop %v1526
  %v1654 = vmul.f32 %v1653, %v1526
  %v1655 = vmul.f32 %v1654, %v1653
  %v1656 = vmul.f32 0.5, %v1655
  %v1657 = vsub.f32 1.5, %v1656
  %v1658 = vmul.f32 %v1653, %v1657
  %vm1659 = vweird.f32 %v1526
  %vm1660 = vweird.f32 %v1653
  %vm1661 = vmor %vm1659, %vm1660
  %v1662 = vsel %vm1661, %v1653, %v1658
  %v1663 = vrsqrt.pop %v1527
  %v1664 = vmul.f32 %v1663, %v1527
  %v1665 = vmul.f32 %v1664, %v1663
  %v1666 = vmul.f32 0.5, %v1665
  %v1667 = vsub.f32 1.5, %v1666
  %v1668 = vmul.f32 %v1663, %v1667
  %vm1669 = vweird.f32 %v1527
  %vm1670 = vweird.f32 %v1663
  %vm1671 = vmor %vm1669, %vm1670
  %v1672 = vsel %vm1671, %v1663, %v1668
  %v1673 = vrsqrt.pop %v1528
  %v1674 = vmul.f32 %v1673, %v1528
  %v1675 = vmul.f32 %v1674, %v1673
  %v1676 = vmul.f32 0.5, %v1675
  %v1677 = vsub.f32 1.5, %v1676
  %v1678 = vmul.f32 %v1673, %v1677
  %vm1679 = vweird.f32 %v1528
  %vm1680 = vweird.f32 %v1673
  %vm1681 = vmor %vm1679, %vm1680
  %v1682 = vsel %vm1681, %v1673, %v1678
  %v1683 = vrsqrt.pop %v1529
  %v1684 = vmul.f32 %v1683, %v1529
  %v1685 = vmul.f32 %v1684, %v1683
  %v1686 = vmul.f32 0.5, %v1685
  %v1687 = vsub.f32 1.5, %v1686
  %v1688 = vmul.f32 %v1683, %v1687
  %vm1689 = vweird.f32 %v1529
  %vm1690 = vweird.f32 %v1683
  %vm1691 = vmor %vm1689, %vm1690
  %v1692 = vsel %vm1691, %v1683, %v1688
  %v1693 = vrsqrt.pop %v1530
  %v1694 = vmul.f32 %v1693, %v1530
  %v1695 = vmul.f32 %v1694, %v1693
  %v1696 = vmul.f32 0.5, %v1695
  %v1697 = vsub.f32 1.5, %v1696
  %v1698 = vmul.f32 %v1693, %v1697
  %vm1699 = vweird.f32 %v1530
  %vm1700 = vweird.f32 %v1693
  %vm1701 = vmor %vm1699, %vm1700
  %v1702 = vsel %vm1701, %v1693, %v1698
  %v1703 = vrsqrt.pop %v1531
  %v1704 = vmul.f32 %v1703, %v1531
  %v1705 = vmul.f32 %v1704, %v1703
  %v1706 = vmul.f32 0.5, %v1705
  %v1707 = vsub.f32 1.5, %v1706
  %v1708 = vmul.f32 %v1703, %v1707
  %vm1709 = vweird.f32 %v1531
  %vm1710 = vweird.f32 %v1703
  %vm1711 = vmor %vm1709, %vm1710
  %v1712 = vsel %vm1711, %v1703, %v1708
  %v1713 = vrsqrt.pop %v1532
  %v1714 = vmul.f32 %v1713, %v1532
  %v1715 = vmul.f32 %v1714, %v1713
  %v1716 = vmul.f32 0.5, %v1715
  %v1717 = vsub.f32 1.5, %v1716
  %v1718 = vmul.f32 %v1713, %v1717
  %vm1719 = vweird.f32 %v1532
  %vm1720 = vweird.f32 %v1713
  %vm1721 = vmor %vm1719, %vm1720
  %v1722 = vsel %vm1721, %v1713, %v1718
  %v1723 = vmul.f32 %v1495, %v1542
  %v1724 = vmul.f32 %v1496, %v1552
  %v1725 = vmul.f32 %v1497, %v1562
  %v1726 = vmul.f32 %v1498, %v1572
  %v1727 = vmul.f32 %v1499, %v1582
  %v1728 = vmul.f32 %v1500, %v1592
  %v1729 = vmul.f32 %v1501, %v1602
  %v1730 = vmul.f32 %v1502, %v1612
  %v1731 = vmul.f32 %v1503, %v1622
  %v1732 = vmul.f32 %v1504, %v1632
  %v1733 = vmul.f32 %v1505, %v1642
  %v1734 = vmul.f32 %v1506, %v1652
  %v1735 = vmul.f32 %v1507, %v1662
  %v1736 = vmul.f32 %v1508, %v1672
  %v1737 = vmul.f32 %v1509, %v1682
  %v1738 = vmul.f32 %v1510, %v1692
  %v1739 = vmul.f32 %v1511, %v1702
  %v1740 = vmul.f32 %v1512, %v1712
  %v1741 = vmul.f32 %v1513, %v1722
  %v1742 = vperm.slane %v30, 4
  %v1743 = vmul.f32 %v1723, %v1742
  %v1744 = vmul.f32 %v1724, %v1742
  %v1745 = vmul.f32 %v1725, %v1742
  %v1746 = vmul.f32 %v1726, %v1742
  %v1747 = vmul.f32 %v1727, %v1742
  %v1748 = vmul.f32 %v1728, %v1742
  %v1749 = vmul.f32 %v1729, %v1742
  %v1750 = vmul.f32 %v1730, %v1742
  %v1751 = vmul.f32 %v1731, %v1742
  %v1752 = vmul.f32 %v1732, %v1742
  %v1753 = vmul.f32 %v1733, %v1742
  %v1754 = vmul.f32 %v1734, %v1742
  %v1755 = vmul.f32 %v1735, %v1742
  %v1756 = vmul.f32 %v1736, %v1742
  %v1757 = vmul.f32 %v1737, %v1742
  %v1758 = vmul.f32 %v1738, %v1742
  %v1759 = vmul.f32 %v1739, %v1742
  %v1760 = vmul.f32 %v1740, %v1742
  %v1761 = vmul.f32 %v1741, %v1742
  %v1762 = vperm.slane %v30, 5
  %v1763 = vadd.f32 %v1743, %v1762
  %v1764 = vadd.f32 %v1744, %v1762
  %v1765 = vadd.f32 %v1745, %v1762
  %v1766 = vadd.f32 %v1746, %v1762
  %v1767 = vadd.f32 %v1747, %v1762
  %v1768 = vadd.f32 %v1748, %v1762
  %v1769 = vadd.f32 %v1749, %v1762
  %v1770 = vadd.f32 %v1750, %v1762
  %v1771 = vadd.f32 %v1751, %v1762
  %v1772 = vadd.f32 %v1752, %v1762
  %v1773 = vadd.f32 %v1753, %v1762
  %v1774 = vadd.f32 %v1754, %v1762
  %v1775 = vadd.f32 %v1755, %v1762
  %v1776 = vadd.f32 %v1756, %v1762
  %v1777 = vadd.f32 %v1757, %v1762
  %v1778 = vadd.f32 %v1758, %v1762
  %v1779 = vadd.f32 %v1759, %v1762
  %v1780 = vadd.f32 %v1760, %v1762
  %v1781 = vadd.f32 %v1761, %v1762
  %v1782 = vadd.f32 %v1248, %v1763
  %v1783 = vadd.f32 %v1249, %v1764
  %v1784 = vadd.f32 %v1250, %v1765
  %v1785 = vadd.f32 %v1251, %v1766
  %v1786 = vadd.f32 %v1252, %v1767
  %v1787 = vadd.f32 %v1253, %v1768
  %v1788 = vadd.f32 %v1254, %v1769
  %v1789 = vadd.f32 %v1255, %v1770
  %v1790 = vadd.f32 %v1256, %v1771
  %v1791 = vadd.f32 %v1257, %v1772
  %v1792 = vadd.f32 %v1258, %v1773
  %v1793 = vadd.f32 %v1259, %v1774
  %v1794 = vadd.f32 %v1260, %v1775
  %v1795 = vadd.f32 %v1261, %v1776
  %v1796 = vadd.f32 %v1262, %v1777
  %v1797 = vadd.f32 %v1263, %v1778
  %v1798 = vadd.f32 %v1264, %v1779
  %v1799 = vadd.f32 %v1265, %v1780
  %v1800 = vadd.f32 %v1266, %v1781
  %v1801 = vsel %vm750, %v1782, 0.0
  %1802 = vadd.xlane.f32.xlu0 %v1801
  %v1803 = vpop.xlane.xlu0 %1802
  %v1804 = vsel %vm750, %v1783, 0.0
  %1805 = vadd.xlane.f32.xlu0 %v1804
  %v1806 = vpop.xlane.xlu0 %1805
  %v1807 = vsel %vm750, %v1784, 0.0
  %1808 = vadd.xlane.f32.xlu0 %v1807
  %v1809 = vpop.xlane.xlu0 %1808
  %v1810 = vsel %vm750, %v1785, 0.0
  %1811 = vadd.xlane.f32.xlu0 %v1810
  %v1812 = vpop.xlane.xlu0 %1811
  %v1813 = vsel %vm750, %v1786, 0.0
  %1814 = vadd.xlane.f32.xlu0 %v1813
  %v1815 = vpop.xlane.xlu0 %1814
  %v1816 = vsel %vm750, %v1787, 0.0
  %1817 = vadd.xlane.f32.xlu0 %v1816
  %v1818 = vpop.xlane.xlu0 %1817
  %v1819 = vsel %vm750, %v1788, 0.0
  %1820 = vadd.xlane.f32.xlu0 %v1819
  %v1821 = vpop.xlane.xlu0 %1820
  %v1822 = vsel %vm750, %v1789, 0.0
  %1823 = vadd.xlane.f32.xlu0 %v1822
  %v1824 = vpop.xlane.xlu0 %1823
  %v1825 = vsel %vm750, %v1790, 0.0
  %1826 = vadd.xlane.f32.xlu0 %v1825
  %v1827 = vpop.xlane.xlu0 %1826
  %v1828 = vsel %vm750, %v1791, 0.0
  %1829 = vadd.xlane.f32.xlu0 %v1828
  %v1830 = vpop.xlane.xlu0 %1829
  %v1831 = vsel %vm750, %v1792, 0.0
  %1832 = vadd.xlane.f32.xlu0 %v1831
  %v1833 = vpop.xlane.xlu0 %1832
  %v1834 = vsel %vm750, %v1793, 0.0
  %1835 = vadd.xlane.f32.xlu0 %v1834
  %v1836 = vpop.xlane.xlu0 %1835
  %v1837 = vsel %vm750, %v1794, 0.0
  %1838 = vadd.xlane.f32.xlu0 %v1837
  %v1839 = vpop.xlane.xlu0 %1838
  %v1840 = vsel %vm750, %v1795, 0.0
  %1841 = vadd.xlane.f32.xlu0 %v1840
  %v1842 = vpop.xlane.xlu0 %1841
  %v1843 = vsel %vm750, %v1796, 0.0
  %1844 = vadd.xlane.f32.xlu0 %v1843
  %v1845 = vpop.xlane.xlu0 %1844
  %v1846 = vsel %vm750, %v1797, 0.0
  %1847 = vadd.xlane.f32.xlu0 %v1846
  %v1848 = vpop.xlane.xlu0 %1847
  %v1849 = vsel %vm750, %v1798, 0.0
  %1850 = vadd.xlane.f32.xlu0 %v1849
  %v1851 = vpop.xlane.xlu0 %1850
  %v1852 = vsel %vm750, %v1799, 0.0
  %1853 = vadd.xlane.f32.xlu0 %v1852
  %v1854 = vpop.xlane.xlu0 %1853
  %v1855 = vsel %vm805, %v1800, 0.0
  %1856 = vadd.xlane.f32.xlu0 %v1855
  %v1857 = vpop.xlane.xlu0 %1856
  %v1858 = vmul.f32 %v1803, 0.03125
  %v1859 = vmul.f32 %v1806, 0.03125
  %v1860 = vmul.f32 %v1809, 0.03125
  %v1861 = vmul.f32 %v1812, 0.03125
  %v1862 = vmul.f32 %v1815, 0.03125
  %v1863 = vmul.f32 %v1818, 0.03125
  %v1864 = vmul.f32 %v1821, 0.03125
  %v1865 = vmul.f32 %v1824, 0.03125
  %v1866 = vmul.f32 %v1827, 0.03125
  %v1867 = vmul.f32 %v1830, 0.03125
  %v1868 = vmul.f32 %v1833, 0.03125
  %v1869 = vmul.f32 %v1836, 0.03125
  %v1870 = vmul.f32 %v1839, 0.03125
  %v1871 = vmul.f32 %v1842, 0.03125
  %v1872 = vmul.f32 %v1845, 0.03125
  %v1873 = vmul.f32 %v1848, 0.03125
  %v1874 = vmul.f32 %v1851, 0.03125
  %v1875 = vmul.f32 %v1854, 0.03125
  %v1876 = vmul.f32 %v1857, 0.03125
  %v1877 = vmul.f32 %v1782, %v1782
  %v1878 = vmul.f32 %v1783, %v1783
  %v1879 = vmul.f32 %v1784, %v1784
  %v1880 = vmul.f32 %v1785, %v1785
  %v1881 = vmul.f32 %v1786, %v1786
  %v1882 = vmul.f32 %v1787, %v1787
  %v1883 = vmul.f32 %v1788, %v1788
  %v1884 = vmul.f32 %v1789, %v1789
  %v1885 = vmul.f32 %v1790, %v1790
  %v1886 = vmul.f32 %v1791, %v1791
  %v1887 = vmul.f32 %v1792, %v1792
  %v1888 = vmul.f32 %v1793, %v1793
  %v1889 = vmul.f32 %v1794, %v1794
  %v1890 = vmul.f32 %v1795, %v1795
  %v1891 = vmul.f32 %v1796, %v1796
  %v1892 = vmul.f32 %v1797, %v1797
  %v1893 = vmul.f32 %v1798, %v1798
  %v1894 = vmul.f32 %v1799, %v1799
  %v1895 = vmul.f32 %v1800, %v1800
  %v1896 = vsel %vm750, %v1877, 0.0
  %1897 = vadd.xlane.f32.xlu0 %v1896
  %v1898 = vpop.xlane.xlu0 %1897
  %v1899 = vsel %vm750, %v1878, 0.0
  %1900 = vadd.xlane.f32.xlu0 %v1899
  %v1901 = vpop.xlane.xlu0 %1900
  %v1902 = vsel %vm750, %v1879, 0.0
  %1903 = vadd.xlane.f32.xlu0 %v1902
  %v1904 = vpop.xlane.xlu0 %1903
  %v1905 = vsel %vm750, %v1880, 0.0
  %1906 = vadd.xlane.f32.xlu0 %v1905
  %v1907 = vpop.xlane.xlu0 %1906
  %v1908 = vsel %vm750, %v1881, 0.0
  %1909 = vadd.xlane.f32.xlu0 %v1908
  %v1910 = vpop.xlane.xlu0 %1909
  %v1911 = vsel %vm750, %v1882, 0.0
  %1912 = vadd.xlane.f32.xlu0 %v1911
  %v1913 = vpop.xlane.xlu0 %1912
  %v1914 = vsel %vm750, %v1883, 0.0
  %1915 = vadd.xlane.f32.xlu0 %v1914
  %v1916 = vpop.xlane.xlu0 %1915
  %v1917 = vsel %vm750, %v1884, 0.0
  %1918 = vadd.xlane.f32.xlu0 %v1917
  %v1919 = vpop.xlane.xlu0 %1918
  %v1920 = vsel %vm750, %v1885, 0.0
  %1921 = vadd.xlane.f32.xlu0 %v1920
  %v1922 = vpop.xlane.xlu0 %1921
  %v1923 = vsel %vm750, %v1886, 0.0
  %1924 = vadd.xlane.f32.xlu0 %v1923
  %v1925 = vpop.xlane.xlu0 %1924
  %v1926 = vsel %vm750, %v1887, 0.0
  %1927 = vadd.xlane.f32.xlu0 %v1926
  %v1928 = vpop.xlane.xlu0 %1927
  %v1929 = vsel %vm750, %v1888, 0.0
  %1930 = vadd.xlane.f32.xlu0 %v1929
  %v1931 = vpop.xlane.xlu0 %1930
  %v1932 = vsel %vm750, %v1889, 0.0
  %1933 = vadd.xlane.f32.xlu0 %v1932
  %v1934 = vpop.xlane.xlu0 %1933
  %v1935 = vsel %vm750, %v1890, 0.0
  %1936 = vadd.xlane.f32.xlu0 %v1935
  %v1937 = vpop.xlane.xlu0 %1936
  %v1938 = vsel %vm750, %v1891, 0.0
  %1939 = vadd.xlane.f32.xlu0 %v1938
  %v1940 = vpop.xlane.xlu0 %1939
  %v1941 = vsel %vm750, %v1892, 0.0
  %1942 = vadd.xlane.f32.xlu0 %v1941
  %v1943 = vpop.xlane.xlu0 %1942
  %v1944 = vsel %vm750, %v1893, 0.0
  %1945 = vadd.xlane.f32.xlu0 %v1944
  %v1946 = vpop.xlane.xlu0 %1945
  %v1947 = vsel %vm750, %v1894, 0.0
  %1948 = vadd.xlane.f32.xlu0 %v1947
  %v1949 = vpop.xlane.xlu0 %1948
  %v1950 = vsel %vm805, %v1895, 0.0
  %1951 = vadd.xlane.f32.xlu0 %v1950
  %v1952 = vpop.xlane.xlu0 %1951
  %v1953 = vmul.f32 %v1898, 0.03125
  %v1954 = vmul.f32 %v1901, 0.03125
  %v1955 = vmul.f32 %v1904, 0.03125
  %v1956 = vmul.f32 %v1907, 0.03125
  %v1957 = vmul.f32 %v1910, 0.03125
  %v1958 = vmul.f32 %v1913, 0.03125
  %v1959 = vmul.f32 %v1916, 0.03125
  %v1960 = vmul.f32 %v1919, 0.03125
  %v1961 = vmul.f32 %v1922, 0.03125
  %v1962 = vmul.f32 %v1925, 0.03125
  %v1963 = vmul.f32 %v1928, 0.03125
  %v1964 = vmul.f32 %v1931, 0.03125
  %v1965 = vmul.f32 %v1934, 0.03125
  %v1966 = vmul.f32 %v1937, 0.03125
  %v1967 = vmul.f32 %v1940, 0.03125
  %v1968 = vmul.f32 %v1943, 0.03125
  %v1969 = vmul.f32 %v1946, 0.03125
  %v1970 = vmul.f32 %v1949, 0.03125
  %v1971 = vmul.f32 %v1952, 0.03125
  %v1972 = vmul.f32 %v1858, %v1858
  %v1973 = vmul.f32 %v1859, %v1859
  %v1974 = vmul.f32 %v1860, %v1860
  %v1975 = vmul.f32 %v1861, %v1861
  %v1976 = vmul.f32 %v1862, %v1862
  %v1977 = vmul.f32 %v1863, %v1863
  %v1978 = vmul.f32 %v1864, %v1864
  %v1979 = vmul.f32 %v1865, %v1865
  %v1980 = vmul.f32 %v1866, %v1866
  %v1981 = vmul.f32 %v1867, %v1867
  %v1982 = vmul.f32 %v1868, %v1868
  %v1983 = vmul.f32 %v1869, %v1869
  %v1984 = vmul.f32 %v1870, %v1870
  %v1985 = vmul.f32 %v1871, %v1871
  %v1986 = vmul.f32 %v1872, %v1872
  %v1987 = vmul.f32 %v1873, %v1873
  %v1988 = vmul.f32 %v1874, %v1874
  %v1989 = vmul.f32 %v1875, %v1875
  %v1990 = vmul.f32 %v1876, %v1876
  %v1991 = vsub.f32 %v1953, %v1972
  %v1992 = vsub.f32 %v1954, %v1973
  %v1993 = vsub.f32 %v1955, %v1974
  %v1994 = vsub.f32 %v1956, %v1975
  %v1995 = vsub.f32 %v1957, %v1976
  %v1996 = vsub.f32 %v1958, %v1977
  %v1997 = vsub.f32 %v1959, %v1978
  %v1998 = vsub.f32 %v1960, %v1979
  %v1999 = vsub.f32 %v1961, %v1980
  %v2000 = vsub.f32 %v1962, %v1981
  %v2001 = vsub.f32 %v1963, %v1982
  %v2002 = vsub.f32 %v1964, %v1983
  %v2003 = vsub.f32 %v1965, %v1984
  %v2004 = vsub.f32 %v1966, %v1985
  %v2005 = vsub.f32 %v1967, %v1986
  %v2006 = vsub.f32 %v1968, %v1987
  %v2007 = vsub.f32 %v1969, %v1988
  %v2008 = vsub.f32 %v1970, %v1989
  %v2009 = vsub.f32 %v1971, %v1990
  %v2010 = vmax.f32 %v1991, 0.0
  %v2011 = vmax.f32 %v1992, 0.0
  %v2012 = vmax.f32 %v1993, 0.0
  %v2013 = vmax.f32 %v1994, 0.0
  %v2014 = vmax.f32 %v1995, 0.0
  %v2015 = vmax.f32 %v1996, 0.0
  %v2016 = vmax.f32 %v1997, 0.0
  %v2017 = vmax.f32 %v1998, 0.0
  %v2018 = vmax.f32 %v1999, 0.0
  %v2019 = vmax.f32 %v2000, 0.0
  %v2020 = vmax.f32 %v2001, 0.0
  %v2021 = vmax.f32 %v2002, 0.0
  %v2022 = vmax.f32 %v2003, 0.0
  %v2023 = vmax.f32 %v2004, 0.0
  %v2024 = vmax.f32 %v2005, 0.0
  %v2025 = vmax.f32 %v2006, 0.0
  %v2026 = vmax.f32 %v2007, 0.0
  %v2027 = vmax.f32 %v2008, 0.0
  %v2028 = vmax.f32 %v2009, 0.0
  %v2029 = vsub.f32 %v1782, %v1858
  %v2030 = vsub.f32 %v1783, %v1859
  %v2031 = vsub.f32 %v1784, %v1860
  %v2032 = vsub.f32 %v1785, %v1861
  %v2033 = vsub.f32 %v1786, %v1862
  %v2034 = vsub.f32 %v1787, %v1863
  %v2035 = vsub.f32 %v1788, %v1864
  %v2036 = vsub.f32 %v1789, %v1865
  %v2037 = vsub.f32 %v1790, %v1866
  %v2038 = vsub.f32 %v1791, %v1867
  %v2039 = vsub.f32 %v1792, %v1868
  %v2040 = vsub.f32 %v1793, %v1869
  %v2041 = vsub.f32 %v1794, %v1870
  %v2042 = vsub.f32 %v1795, %v1871
  %v2043 = vsub.f32 %v1796, %v1872
  %v2044 = vsub.f32 %v1797, %v1873
  %v2045 = vsub.f32 %v1798, %v1874
  %v2046 = vsub.f32 %v1799, %v1875
  %v2047 = vsub.f32 %v1800, %v1876
  %v2048 = vadd.f32 %v2010, 1e-12
  %v2049 = vadd.f32 %v2011, 1e-12
  %v2050 = vadd.f32 %v2012, 1e-12
  %v2051 = vadd.f32 %v2013, 1e-12
  %v2052 = vadd.f32 %v2014, 1e-12
  %v2053 = vadd.f32 %v2015, 1e-12
  %v2054 = vadd.f32 %v2016, 1e-12
  %v2055 = vadd.f32 %v2017, 1e-12
  %v2056 = vadd.f32 %v2018, 1e-12
  %v2057 = vadd.f32 %v2019, 1e-12
  %v2058 = vadd.f32 %v2020, 1e-12
  %v2059 = vadd.f32 %v2021, 1e-12
  %v2060 = vadd.f32 %v2022, 1e-12
  %v2061 = vadd.f32 %v2023, 1e-12
  %v2062 = vadd.f32 %v2024, 1e-12
  %v2063 = vadd.f32 %v2025, 1e-12
  %v2064 = vadd.f32 %v2026, 1e-12
  %v2065 = vadd.f32 %v2027, 1e-12
  %v2066 = vadd.f32 %v2028, 1e-12
  %v2067 = vrsqrt.pop %v2048
  %v2068 = vmul.f32 %v2067, %v2048
  %v2069 = vmul.f32 %v2068, %v2067
  %v2070 = vmul.f32 0.5, %v2069
  %v2071 = vsub.f32 1.5, %v2070
  %v2072 = vmul.f32 %v2067, %v2071
  %vm2073 = vweird.f32 %v2048
  %vm2074 = vweird.f32 %v2067
  %vm2075 = vmor %vm2073, %vm2074
  %v2076 = vsel %vm2075, %v2067, %v2072
  %v2077 = vrsqrt.pop %v2049
  %v2078 = vmul.f32 %v2077, %v2049
  %v2079 = vmul.f32 %v2078, %v2077
  %v2080 = vmul.f32 0.5, %v2079
  %v2081 = vsub.f32 1.5, %v2080
  %v2082 = vmul.f32 %v2077, %v2081
  %vm2083 = vweird.f32 %v2049
  %vm2084 = vweird.f32 %v2077
  %vm2085 = vmor %vm2083, %vm2084
  %v2086 = vsel %vm2085, %v2077, %v2082
  %v2087 = vrsqrt.pop %v2050
  %v2088 = vmul.f32 %v2087, %v2050
  %v2089 = vmul.f32 %v2088, %v2087
  %v2090 = vmul.f32 0.5, %v2089
  %v2091 = vsub.f32 1.5, %v2090
  %v2092 = vmul.f32 %v2087, %v2091
  %vm2093 = vweird.f32 %v2050
  %vm2094 = vweird.f32 %v2087
  %vm2095 = vmor %vm2093, %vm2094
  %v2096 = vsel %vm2095, %v2087, %v2092
  %v2097 = vrsqrt.pop %v2051
  %v2098 = vmul.f32 %v2097, %v2051
  %v2099 = vmul.f32 %v2098, %v2097
  %v2100 = vmul.f32 0.5, %v2099
  %v2101 = vsub.f32 1.5, %v2100
  %v2102 = vmul.f32 %v2097, %v2101
  %vm2103 = vweird.f32 %v2051
  %vm2104 = vweird.f32 %v2097
  %vm2105 = vmor %vm2103, %vm2104
  %v2106 = vsel %vm2105, %v2097, %v2102
  %v2107 = vrsqrt.pop %v2052
  %v2108 = vmul.f32 %v2107, %v2052
  %v2109 = vmul.f32 %v2108, %v2107
  %v2110 = vmul.f32 0.5, %v2109
  %v2111 = vsub.f32 1.5, %v2110
  %v2112 = vmul.f32 %v2107, %v2111
  %vm2113 = vweird.f32 %v2052
  %vm2114 = vweird.f32 %v2107
  %vm2115 = vmor %vm2113, %vm2114
  %v2116 = vsel %vm2115, %v2107, %v2112
  %v2117 = vrsqrt.pop %v2053
  %v2118 = vmul.f32 %v2117, %v2053
  %v2119 = vmul.f32 %v2118, %v2117
  %v2120 = vmul.f32 0.5, %v2119
  %v2121 = vsub.f32 1.5, %v2120
  %v2122 = vmul.f32 %v2117, %v2121
  %vm2123 = vweird.f32 %v2053
  %vm2124 = vweird.f32 %v2117
  %vm2125 = vmor %vm2123, %vm2124
  %v2126 = vsel %vm2125, %v2117, %v2122
  %v2127 = vrsqrt.pop %v2054
  %v2128 = vmul.f32 %v2127, %v2054
  %v2129 = vmul.f32 %v2128, %v2127
  %v2130 = vmul.f32 0.5, %v2129
  %v2131 = vsub.f32 1.5, %v2130
  %v2132 = vmul.f32 %v2127, %v2131
  %vm2133 = vweird.f32 %v2054
  %vm2134 = vweird.f32 %v2127
  %vm2135 = vmor %vm2133, %vm2134
  %v2136 = vsel %vm2135, %v2127, %v2132
  %v2137 = vrsqrt.pop %v2055
  %v2138 = vmul.f32 %v2137, %v2055
  %v2139 = vmul.f32 %v2138, %v2137
  %v2140 = vmul.f32 0.5, %v2139
  %v2141 = vsub.f32 1.5, %v2140
  %v2142 = vmul.f32 %v2137, %v2141
  %vm2143 = vweird.f32 %v2055
  %vm2144 = vweird.f32 %v2137
  %vm2145 = vmor %vm2143, %vm2144
  %v2146 = vsel %vm2145, %v2137, %v2142
  %v2147 = vrsqrt.pop %v2056
  %v2148 = vmul.f32 %v2147, %v2056
  %v2149 = vmul.f32 %v2148, %v2147
  %v2150 = vmul.f32 0.5, %v2149
  %v2151 = vsub.f32 1.5, %v2150
  %v2152 = vmul.f32 %v2147, %v2151
  %vm2153 = vweird.f32 %v2056
  %vm2154 = vweird.f32 %v2147
  %vm2155 = vmor %vm2153, %vm2154
  %v2156 = vsel %vm2155, %v2147, %v2152
  %v2157 = vrsqrt.pop %v2057
  %v2158 = vmul.f32 %v2157, %v2057
  %v2159 = vmul.f32 %v2158, %v2157
  %v2160 = vmul.f32 0.5, %v2159
  %v2161 = vsub.f32 1.5, %v2160
  %v2162 = vmul.f32 %v2157, %v2161
  %vm2163 = vweird.f32 %v2057
  %vm2164 = vweird.f32 %v2157
  %vm2165 = vmor %vm2163, %vm2164
  %v2166 = vsel %vm2165, %v2157, %v2162
  %v2167 = vrsqrt.pop %v2058
  %v2168 = vmul.f32 %v2167, %v2058
  %v2169 = vmul.f32 %v2168, %v2167
  %v2170 = vmul.f32 0.5, %v2169
  %v2171 = vsub.f32 1.5, %v2170
  %v2172 = vmul.f32 %v2167, %v2171
  %vm2173 = vweird.f32 %v2058
  %vm2174 = vweird.f32 %v2167
  %vm2175 = vmor %vm2173, %vm2174
  %v2176 = vsel %vm2175, %v2167, %v2172
  %v2177 = vrsqrt.pop %v2059
  %v2178 = vmul.f32 %v2177, %v2059
  %v2179 = vmul.f32 %v2178, %v2177
  %v2180 = vmul.f32 0.5, %v2179
  %v2181 = vsub.f32 1.5, %v2180
  %v2182 = vmul.f32 %v2177, %v2181
  %vm2183 = vweird.f32 %v2059
  %vm2184 = vweird.f32 %v2177
  %vm2185 = vmor %vm2183, %vm2184
  %v2186 = vsel %vm2185, %v2177, %v2182
  %v2187 = vrsqrt.pop %v2060
  %v2188 = vmul.f32 %v2187, %v2060
  %v2189 = vmul.f32 %v2188, %v2187
  %v2190 = vmul.f32 0.5, %v2189
  %v2191 = vsub.f32 1.5, %v2190
  %v2192 = vmul.f32 %v2187, %v2191
  %vm2193 = vweird.f32 %v2060
  %vm2194 = vweird.f32 %v2187
  %vm2195 = vmor %vm2193, %vm2194
  %v2196 = vsel %vm2195, %v2187, %v2192
  %v2197 = vrsqrt.pop %v2061
  %v2198 = vmul.f32 %v2197, %v2061
  %v2199 = vmul.f32 %v2198, %v2197
  %v2200 = vmul.f32 0.5, %v2199
  %v2201 = vsub.f32 1.5, %v2200
  %v2202 = vmul.f32 %v2197, %v2201
  %vm2203 = vweird.f32 %v2061
  %vm2204 = vweird.f32 %v2197
  %vm2205 = vmor %vm2203, %vm2204
  %v2206 = vsel %vm2205, %v2197, %v2202
  %v2207 = vrsqrt.pop %v2062
  %v2208 = vmul.f32 %v2207, %v2062
  %v2209 = vmul.f32 %v2208, %v2207
  %v2210 = vmul.f32 0.5, %v2209
  %v2211 = vsub.f32 1.5, %v2210
  %v2212 = vmul.f32 %v2207, %v2211
  %vm2213 = vweird.f32 %v2062
  %vm2214 = vweird.f32 %v2207
  %vm2215 = vmor %vm2213, %vm2214
  %v2216 = vsel %vm2215, %v2207, %v2212
  %v2217 = vrsqrt.pop %v2063
  %v2218 = vmul.f32 %v2217, %v2063
  %v2219 = vmul.f32 %v2218, %v2217
  %v2220 = vmul.f32 0.5, %v2219
  %v2221 = vsub.f32 1.5, %v2220
  %v2222 = vmul.f32 %v2217, %v2221
  %vm2223 = vweird.f32 %v2063
  %vm2224 = vweird.f32 %v2217
  %vm2225 = vmor %vm2223, %vm2224
  %v2226 = vsel %vm2225, %v2217, %v2222
  %v2227 = vrsqrt.pop %v2064
  %v2228 = vmul.f32 %v2227, %v2064
  %v2229 = vmul.f32 %v2228, %v2227
  %v2230 = vmul.f32 0.5, %v2229
  %v2231 = vsub.f32 1.5, %v2230
  %v2232 = vmul.f32 %v2227, %v2231
  %vm2233 = vweird.f32 %v2064
  %vm2234 = vweird.f32 %v2227
  %vm2235 = vmor %vm2233, %vm2234
  %v2236 = vsel %vm2235, %v2227, %v2232
  %v2237 = vrsqrt.pop %v2065
  %v2238 = vmul.f32 %v2237, %v2065
  %v2239 = vmul.f32 %v2238, %v2237
  %v2240 = vmul.f32 0.5, %v2239
  %v2241 = vsub.f32 1.5, %v2240
  %v2242 = vmul.f32 %v2237, %v2241
  %vm2243 = vweird.f32 %v2065
  %vm2244 = vweird.f32 %v2237
  %vm2245 = vmor %vm2243, %vm2244
  %v2246 = vsel %vm2245, %v2237, %v2242
  %v2247 = vrsqrt.pop %v2066
  %v2248 = vmul.f32 %v2247, %v2066
  %v2249 = vmul.f32 %v2248, %v2247
  %v2250 = vmul.f32 0.5, %v2249
  %v2251 = vsub.f32 1.5, %v2250
  %v2252 = vmul.f32 %v2247, %v2251
  %vm2253 = vweird.f32 %v2066
  %vm2254 = vweird.f32 %v2247
  %vm2255 = vmor %vm2253, %vm2254
  %v2256 = vsel %vm2255, %v2247, %v2252
  %v2257 = vmul.f32 %v2029, %v2076
  %v2258 = vmul.f32 %v2030, %v2086
  %v2259 = vmul.f32 %v2031, %v2096
  %v2260 = vmul.f32 %v2032, %v2106
  %v2261 = vmul.f32 %v2033, %v2116
  %v2262 = vmul.f32 %v2034, %v2126
  %v2263 = vmul.f32 %v2035, %v2136
  %v2264 = vmul.f32 %v2036, %v2146
  %v2265 = vmul.f32 %v2037, %v2156
  %v2266 = vmul.f32 %v2038, %v2166
  %v2267 = vmul.f32 %v2039, %v2176
  %v2268 = vmul.f32 %v2040, %v2186
  %v2269 = vmul.f32 %v2041, %v2196
  %v2270 = vmul.f32 %v2042, %v2206
  %v2271 = vmul.f32 %v2043, %v2216
  %v2272 = vmul.f32 %v2044, %v2226
  %v2273 = vmul.f32 %v2045, %v2236
  %v2274 = vmul.f32 %v2046, %v2246
  %v2275 = vmul.f32 %v2047, %v2256
  %v2276 = vperm.slane %v30, 6
  %v2277 = vmul.f32 %v2257, %v2276
  %v2278 = vmul.f32 %v2258, %v2276
  %v2279 = vmul.f32 %v2259, %v2276
  %v2280 = vmul.f32 %v2260, %v2276
  %v2281 = vmul.f32 %v2261, %v2276
  %v2282 = vmul.f32 %v2262, %v2276
  %v2283 = vmul.f32 %v2263, %v2276
  %v2284 = vmul.f32 %v2264, %v2276
  %v2285 = vmul.f32 %v2265, %v2276
  %v2286 = vmul.f32 %v2266, %v2276
  %v2287 = vmul.f32 %v2267, %v2276
  %v2288 = vmul.f32 %v2268, %v2276
  %v2289 = vmul.f32 %v2269, %v2276
  %v2290 = vmul.f32 %v2270, %v2276
  %v2291 = vmul.f32 %v2271, %v2276
  %v2292 = vmul.f32 %v2272, %v2276
  %v2293 = vmul.f32 %v2273, %v2276
  %v2294 = vmul.f32 %v2274, %v2276
  %v2295 = vmul.f32 %v2275, %v2276
  %v2296 = vperm.slane %v30, 7
  %v2297 = vadd.f32 %v2277, %v2296
  %v2298 = vadd.f32 %v2278, %v2296
  %v2299 = vadd.f32 %v2279, %v2296
  %v2300 = vadd.f32 %v2280, %v2296
  %v2301 = vadd.f32 %v2281, %v2296
  %v2302 = vadd.f32 %v2282, %v2296
  %v2303 = vadd.f32 %v2283, %v2296
  %v2304 = vadd.f32 %v2284, %v2296
  %v2305 = vadd.f32 %v2285, %v2296
  %v2306 = vadd.f32 %v2286, %v2296
  %v2307 = vadd.f32 %v2287, %v2296
  %v2308 = vadd.f32 %v2288, %v2296
  %v2309 = vadd.f32 %v2289, %v2296
  %v2310 = vadd.f32 %v2290, %v2296
  %v2311 = vadd.f32 %v2291, %v2296
  %v2312 = vadd.f32 %v2292, %v2296
  %v2313 = vadd.f32 %v2293, %v2296
  %v2314 = vadd.f32 %v2294, %v2296
  %v2315 = vadd.f32 %v2295, %v2296
  %2317 = vset.pattern.permute.xlu0 32
  %2318 = vperm.xlu0 %2317, %v300
  %v2319 = vpop.permute.xlu0 %2318
  %2322 = vset.pattern.permute.xlu0 32
  %2323 = vperm.xlu0 %2322, %v301
  %v2324 = vpop.permute.xlu0 %2323
  %2327 = vset.pattern.permute.xlu0 32
  %2328 = vperm.xlu0 %2327, %v302
  %v2329 = vpop.permute.xlu0 %2328
  %2332 = vset.pattern.permute.xlu0 32
  %2333 = vperm.xlu0 %2332, %v303
  %v2334 = vpop.permute.xlu0 %2333
  %2337 = vset.pattern.permute.xlu0 32
  %2338 = vperm.xlu0 %2337, %v304
  %v2339 = vpop.permute.xlu0 %2338
  %2342 = vset.pattern.permute.xlu0 32
  %2343 = vperm.xlu0 %2342, %v305
  %v2344 = vpop.permute.xlu0 %2343
  %2347 = vset.pattern.permute.xlu0 32
  %2348 = vperm.xlu0 %2347, %v306
  %v2349 = vpop.permute.xlu0 %2348
  %2352 = vset.pattern.permute.xlu0 32
  %2353 = vperm.xlu0 %2352, %v307
  %v2354 = vpop.permute.xlu0 %2353
  %2357 = vset.pattern.permute.xlu0 32
  %2358 = vperm.xlu0 %2357, %v308
  %v2359 = vpop.permute.xlu0 %2358
  %2362 = vset.pattern.permute.xlu0 32
  %2363 = vperm.xlu0 %2362, %v309
  %v2364 = vpop.permute.xlu0 %2363
  %2367 = vset.pattern.permute.xlu0 32
  %2368 = vperm.xlu0 %2367, %v310
  %v2369 = vpop.permute.xlu0 %2368
  %2372 = vset.pattern.permute.xlu0 32
  %2373 = vperm.xlu0 %2372, %v311
  %v2374 = vpop.permute.xlu0 %2373
  %2377 = vset.pattern.permute.xlu0 32
  %2378 = vperm.xlu0 %2377, %v312
  %v2379 = vpop.permute.xlu0 %2378
  %2382 = vset.pattern.permute.xlu0 32
  %2383 = vperm.xlu0 %2382, %v313
  %v2384 = vpop.permute.xlu0 %2383
  %2387 = vset.pattern.permute.xlu0 32
  %2388 = vperm.xlu0 %2387, %v314
  %v2389 = vpop.permute.xlu0 %2388
  %2392 = vset.pattern.permute.xlu0 32
  %2393 = vperm.xlu0 %2392, %v315
  %v2394 = vpop.permute.xlu0 %2393
  %2397 = vset.pattern.permute.xlu0 32
  %2398 = vperm.xlu0 %2397, %v316
  %v2399 = vpop.permute.xlu0 %2398
  %2402 = vset.pattern.permute.xlu0 32
  %2403 = vperm.xlu0 %2402, %v317
  %v2404 = vpop.permute.xlu0 %2403
  %2407 = vset.pattern.permute.xlu0 32
  %2408 = vperm.xlu0 %2407, %v318
  %v2409 = vpop.permute.xlu0 %2408
  %v2411 = vmul.f32 %v2319, %v2297
  %v2412 = vmul.f32 %v2324, %v2298
  %v2413 = vmul.f32 %v2329, %v2299
  %v2414 = vmul.f32 %v2334, %v2300
  %v2415 = vmul.f32 %v2339, %v2301
  %v2416 = vmul.f32 %v2344, %v2302
  %v2417 = vmul.f32 %v2349, %v2303
  %v2418 = vmul.f32 %v2354, %v2304
  %v2419 = vmul.f32 %v2359, %v2305
  %v2420 = vmul.f32 %v2364, %v2306
  %v2421 = vmul.f32 %v2369, %v2307
  %v2422 = vmul.f32 %v2374, %v2308
  %v2423 = vmul.f32 %v2379, %v2309
  %v2424 = vmul.f32 %v2384, %v2310
  %v2425 = vmul.f32 %v2389, %v2311
  %v2426 = vmul.f32 %v2394, %v2312
  %v2427 = vmul.f32 %v2399, %v2313
  %v2428 = vmul.f32 %v2404, %v2314
  %v2429 = vmul.f32 %v2409, %v2315
  %v2430 = vadd.f32 %v391, %v2411
  %v2431 = vadd.f32 %v393, %v2412
  %v2432 = vadd.f32 %v396, %v2413
  %v2433 = vadd.f32 %v398, %v2414
  %v2434 = vadd.f32 %v401, %v2415
  %v2435 = vadd.f32 %v403, %v2416
  %v2436 = vadd.f32 %v406, %v2417
  %v2437 = vadd.f32 %v408, %v2418
  %v2438 = vadd.f32 %v411, %v2419
  %v2439 = vadd.f32 %v413, %v2420
  %v2440 = vadd.f32 %v416, %v2421
  %v2441 = vadd.f32 %v418, %v2422
  %v2442 = vadd.f32 %v421, %v2423
  %v2443 = vadd.f32 %v423, %v2424
  %v2444 = vadd.f32 %v426, %v2425
  %v2445 = vadd.f32 %v428, %v2426
  %v2446 = vadd.f32 %v431, %v2427
  %v2447 = vadd.f32 %v433, %v2428
  %v2448 = vadd.f32 %v436, %v2429
  %v2449 = vsel %vm750, %v2430, 0.0
  %2450 = vadd.xlane.f32.xlu0 %v2449
  %v2451 = vpop.xlane.xlu0 %2450
  %v2452 = vsel %vm750, %v2431, 0.0
  %2453 = vadd.xlane.f32.xlu0 %v2452
  %v2454 = vpop.xlane.xlu0 %2453
  %v2455 = vsel %vm750, %v2432, 0.0
  %2456 = vadd.xlane.f32.xlu0 %v2455
  %v2457 = vpop.xlane.xlu0 %2456
  %v2458 = vsel %vm750, %v2433, 0.0
  %2459 = vadd.xlane.f32.xlu0 %v2458
  %v2460 = vpop.xlane.xlu0 %2459
  %v2461 = vsel %vm750, %v2434, 0.0
  %2462 = vadd.xlane.f32.xlu0 %v2461
  %v2463 = vpop.xlane.xlu0 %2462
  %v2464 = vsel %vm750, %v2435, 0.0
  %2465 = vadd.xlane.f32.xlu0 %v2464
  %v2466 = vpop.xlane.xlu0 %2465
  %v2467 = vsel %vm750, %v2436, 0.0
  %2468 = vadd.xlane.f32.xlu0 %v2467
  %v2469 = vpop.xlane.xlu0 %2468
  %v2470 = vsel %vm750, %v2437, 0.0
  %2471 = vadd.xlane.f32.xlu0 %v2470
  %v2472 = vpop.xlane.xlu0 %2471
  %v2473 = vsel %vm750, %v2438, 0.0
  %2474 = vadd.xlane.f32.xlu0 %v2473
  %v2475 = vpop.xlane.xlu0 %2474
  %v2476 = vsel %vm750, %v2439, 0.0
  %2477 = vadd.xlane.f32.xlu0 %v2476
  %v2478 = vpop.xlane.xlu0 %2477
  %v2479 = vsel %vm750, %v2440, 0.0
  %2480 = vadd.xlane.f32.xlu0 %v2479
  %v2481 = vpop.xlane.xlu0 %2480
  %v2482 = vsel %vm750, %v2441, 0.0
  %2483 = vadd.xlane.f32.xlu0 %v2482
  %v2484 = vpop.xlane.xlu0 %2483
  %v2485 = vsel %vm750, %v2442, 0.0
  %2486 = vadd.xlane.f32.xlu0 %v2485
  %v2487 = vpop.xlane.xlu0 %2486
  %v2488 = vsel %vm750, %v2443, 0.0
  %2489 = vadd.xlane.f32.xlu0 %v2488
  %v2490 = vpop.xlane.xlu0 %2489
  %v2491 = vsel %vm750, %v2444, 0.0
  %2492 = vadd.xlane.f32.xlu0 %v2491
  %v2493 = vpop.xlane.xlu0 %2492
  %v2494 = vsel %vm750, %v2445, 0.0
  %2495 = vadd.xlane.f32.xlu0 %v2494
  %v2496 = vpop.xlane.xlu0 %2495
  %v2497 = vsel %vm750, %v2446, 0.0
  %2498 = vadd.xlane.f32.xlu0 %v2497
  %v2499 = vpop.xlane.xlu0 %2498
  %v2500 = vsel %vm750, %v2447, 0.0
  %2501 = vadd.xlane.f32.xlu0 %v2500
  %v2502 = vpop.xlane.xlu0 %2501
  %v2503 = vsel %vm805, %v2448, 0.0
  %2504 = vadd.xlane.f32.xlu0 %v2503
  %v2505 = vpop.xlane.xlu0 %2504
  %v2506 = vmul.f32 %v2451, 0.03125
  %v2507 = vmul.f32 %v2454, 0.03125
  %v2508 = vmul.f32 %v2457, 0.03125
  %v2509 = vmul.f32 %v2460, 0.03125
  %v2510 = vmul.f32 %v2463, 0.03125
  %v2511 = vmul.f32 %v2466, 0.03125
  %v2512 = vmul.f32 %v2469, 0.03125
  %v2513 = vmul.f32 %v2472, 0.03125
  %v2514 = vmul.f32 %v2475, 0.03125
  %v2515 = vmul.f32 %v2478, 0.03125
  %v2516 = vmul.f32 %v2481, 0.03125
  %v2517 = vmul.f32 %v2484, 0.03125
  %v2518 = vmul.f32 %v2487, 0.03125
  %v2519 = vmul.f32 %v2490, 0.03125
  %v2520 = vmul.f32 %v2493, 0.03125
  %v2521 = vmul.f32 %v2496, 0.03125
  %v2522 = vmul.f32 %v2499, 0.03125
  %v2523 = vmul.f32 %v2502, 0.03125
  %v2524 = vmul.f32 %v2505, 0.03125
  %v2525 = vmul.f32 %v2430, %v2430
  %v2526 = vmul.f32 %v2431, %v2431
  %v2527 = vmul.f32 %v2432, %v2432
  %v2528 = vmul.f32 %v2433, %v2433
  %v2529 = vmul.f32 %v2434, %v2434
  %v2530 = vmul.f32 %v2435, %v2435
  %v2531 = vmul.f32 %v2436, %v2436
  %v2532 = vmul.f32 %v2437, %v2437
  %v2533 = vmul.f32 %v2438, %v2438
  %v2534 = vmul.f32 %v2439, %v2439
  %v2535 = vmul.f32 %v2440, %v2440
  %v2536 = vmul.f32 %v2441, %v2441
  %v2537 = vmul.f32 %v2442, %v2442
  %v2538 = vmul.f32 %v2443, %v2443
  %v2539 = vmul.f32 %v2444, %v2444
  %v2540 = vmul.f32 %v2445, %v2445
  %v2541 = vmul.f32 %v2446, %v2446
  %v2542 = vmul.f32 %v2447, %v2447
  %v2543 = vmul.f32 %v2448, %v2448
  %v2544 = vsel %vm750, %v2525, 0.0
  %2545 = vadd.xlane.f32.xlu0 %v2544
  %v2546 = vpop.xlane.xlu0 %2545
  %v2547 = vsel %vm750, %v2526, 0.0
  %2548 = vadd.xlane.f32.xlu0 %v2547
  %v2549 = vpop.xlane.xlu0 %2548
  %v2550 = vsel %vm750, %v2527, 0.0
  %2551 = vadd.xlane.f32.xlu0 %v2550
  %v2552 = vpop.xlane.xlu0 %2551
  %v2553 = vsel %vm750, %v2528, 0.0
  %2554 = vadd.xlane.f32.xlu0 %v2553
  %v2555 = vpop.xlane.xlu0 %2554
  %v2556 = vsel %vm750, %v2529, 0.0
  %2557 = vadd.xlane.f32.xlu0 %v2556
  %v2558 = vpop.xlane.xlu0 %2557
  %v2559 = vsel %vm750, %v2530, 0.0
  %2560 = vadd.xlane.f32.xlu0 %v2559
  %v2561 = vpop.xlane.xlu0 %2560
  %v2562 = vsel %vm750, %v2531, 0.0
  %2563 = vadd.xlane.f32.xlu0 %v2562
  %v2564 = vpop.xlane.xlu0 %2563
  %v2565 = vsel %vm750, %v2532, 0.0
  %2566 = vadd.xlane.f32.xlu0 %v2565
  %v2567 = vpop.xlane.xlu0 %2566
  %v2568 = vsel %vm750, %v2533, 0.0
  %2569 = vadd.xlane.f32.xlu0 %v2568
  %v2570 = vpop.xlane.xlu0 %2569
  %v2571 = vsel %vm750, %v2534, 0.0
  %2572 = vadd.xlane.f32.xlu0 %v2571
  %v2573 = vpop.xlane.xlu0 %2572
  %v2574 = vsel %vm750, %v2535, 0.0
  %2575 = vadd.xlane.f32.xlu0 %v2574
  %v2576 = vpop.xlane.xlu0 %2575
  %v2577 = vsel %vm750, %v2536, 0.0
  %2578 = vadd.xlane.f32.xlu0 %v2577
  %v2579 = vpop.xlane.xlu0 %2578
  %v2580 = vsel %vm750, %v2537, 0.0
  %2581 = vadd.xlane.f32.xlu0 %v2580
  %v2582 = vpop.xlane.xlu0 %2581
  %v2583 = vsel %vm750, %v2538, 0.0
  %2584 = vadd.xlane.f32.xlu0 %v2583
  %v2585 = vpop.xlane.xlu0 %2584
  %v2586 = vsel %vm750, %v2539, 0.0
  %2587 = vadd.xlane.f32.xlu0 %v2586
  %v2588 = vpop.xlane.xlu0 %2587
  %v2589 = vsel %vm750, %v2540, 0.0
  %2590 = vadd.xlane.f32.xlu0 %v2589
  %v2591 = vpop.xlane.xlu0 %2590
  %v2592 = vsel %vm750, %v2541, 0.0
  %2593 = vadd.xlane.f32.xlu0 %v2592
  %v2594 = vpop.xlane.xlu0 %2593
  %v2595 = vsel %vm750, %v2542, 0.0
  %2596 = vadd.xlane.f32.xlu0 %v2595
  %v2597 = vpop.xlane.xlu0 %2596
  %v2598 = vsel %vm805, %v2543, 0.0
  %2599 = vadd.xlane.f32.xlu0 %v2598
  %v2600 = vpop.xlane.xlu0 %2599
  %v2601 = vmul.f32 %v2546, 0.03125
  %v2602 = vmul.f32 %v2549, 0.03125
  %v2603 = vmul.f32 %v2552, 0.03125
  %v2604 = vmul.f32 %v2555, 0.03125
  %v2605 = vmul.f32 %v2558, 0.03125
  %v2606 = vmul.f32 %v2561, 0.03125
  %v2607 = vmul.f32 %v2564, 0.03125
  %v2608 = vmul.f32 %v2567, 0.03125
  %v2609 = vmul.f32 %v2570, 0.03125
  %v2610 = vmul.f32 %v2573, 0.03125
  %v2611 = vmul.f32 %v2576, 0.03125
  %v2612 = vmul.f32 %v2579, 0.03125
  %v2613 = vmul.f32 %v2582, 0.03125
  %v2614 = vmul.f32 %v2585, 0.03125
  %v2615 = vmul.f32 %v2588, 0.03125
  %v2616 = vmul.f32 %v2591, 0.03125
  %v2617 = vmul.f32 %v2594, 0.03125
  %v2618 = vmul.f32 %v2597, 0.03125
  %v2619 = vmul.f32 %v2600, 0.03125
  %v2620 = vmul.f32 %v2506, %v2506
  %v2621 = vmul.f32 %v2507, %v2507
  %v2622 = vmul.f32 %v2508, %v2508
  %v2623 = vmul.f32 %v2509, %v2509
  %v2624 = vmul.f32 %v2510, %v2510
  %v2625 = vmul.f32 %v2511, %v2511
  %v2626 = vmul.f32 %v2512, %v2512
  %v2627 = vmul.f32 %v2513, %v2513
  %v2628 = vmul.f32 %v2514, %v2514
  %v2629 = vmul.f32 %v2515, %v2515
  %v2630 = vmul.f32 %v2516, %v2516
  %v2631 = vmul.f32 %v2517, %v2517
  %v2632 = vmul.f32 %v2518, %v2518
  %v2633 = vmul.f32 %v2519, %v2519
  %v2634 = vmul.f32 %v2520, %v2520
  %v2635 = vmul.f32 %v2521, %v2521
  %v2636 = vmul.f32 %v2522, %v2522
  %v2637 = vmul.f32 %v2523, %v2523
  %v2638 = vmul.f32 %v2524, %v2524
  %v2639 = vsub.f32 %v2601, %v2620
  %v2640 = vsub.f32 %v2602, %v2621
  %v2641 = vsub.f32 %v2603, %v2622
  %v2642 = vsub.f32 %v2604, %v2623
  %v2643 = vsub.f32 %v2605, %v2624
  %v2644 = vsub.f32 %v2606, %v2625
  %v2645 = vsub.f32 %v2607, %v2626
  %v2646 = vsub.f32 %v2608, %v2627
  %v2647 = vsub.f32 %v2609, %v2628
  %v2648 = vsub.f32 %v2610, %v2629
  %v2649 = vsub.f32 %v2611, %v2630
  %v2650 = vsub.f32 %v2612, %v2631
  %v2651 = vsub.f32 %v2613, %v2632
  %v2652 = vsub.f32 %v2614, %v2633
  %v2653 = vsub.f32 %v2615, %v2634
  %v2654 = vsub.f32 %v2616, %v2635
  %v2655 = vsub.f32 %v2617, %v2636
  %v2656 = vsub.f32 %v2618, %v2637
  %v2657 = vsub.f32 %v2619, %v2638
  %v2658 = vmax.f32 %v2639, 0.0
  %v2659 = vmax.f32 %v2640, 0.0
  %v2660 = vmax.f32 %v2641, 0.0
  %v2661 = vmax.f32 %v2642, 0.0
  %v2662 = vmax.f32 %v2643, 0.0
  %v2663 = vmax.f32 %v2644, 0.0
  %v2664 = vmax.f32 %v2645, 0.0
  %v2665 = vmax.f32 %v2646, 0.0
  %v2666 = vmax.f32 %v2647, 0.0
  %v2667 = vmax.f32 %v2648, 0.0
  %v2668 = vmax.f32 %v2649, 0.0
  %v2669 = vmax.f32 %v2650, 0.0
  %v2670 = vmax.f32 %v2651, 0.0
  %v2671 = vmax.f32 %v2652, 0.0
  %v2672 = vmax.f32 %v2653, 0.0
  %v2673 = vmax.f32 %v2654, 0.0
  %v2674 = vmax.f32 %v2655, 0.0
  %v2675 = vmax.f32 %v2656, 0.0
  %v2676 = vmax.f32 %v2657, 0.0
  %v2677 = vsub.f32 %v2430, %v2506
  %v2678 = vsub.f32 %v2431, %v2507
  %v2679 = vsub.f32 %v2432, %v2508
  %v2680 = vsub.f32 %v2433, %v2509
  %v2681 = vsub.f32 %v2434, %v2510
  %v2682 = vsub.f32 %v2435, %v2511
  %v2683 = vsub.f32 %v2436, %v2512
  %v2684 = vsub.f32 %v2437, %v2513
  %v2685 = vsub.f32 %v2438, %v2514
  %v2686 = vsub.f32 %v2439, %v2515
  %v2687 = vsub.f32 %v2440, %v2516
  %v2688 = vsub.f32 %v2441, %v2517
  %v2689 = vsub.f32 %v2442, %v2518
  %v2690 = vsub.f32 %v2443, %v2519
  %v2691 = vsub.f32 %v2444, %v2520
  %v2692 = vsub.f32 %v2445, %v2521
  %v2693 = vsub.f32 %v2446, %v2522
  %v2694 = vsub.f32 %v2447, %v2523
  %v2695 = vsub.f32 %v2448, %v2524
  %v2696 = vadd.f32 %v2658, 1e-12
  %v2697 = vadd.f32 %v2659, 1e-12
  %v2698 = vadd.f32 %v2660, 1e-12
  %v2699 = vadd.f32 %v2661, 1e-12
  %v2700 = vadd.f32 %v2662, 1e-12
  %v2701 = vadd.f32 %v2663, 1e-12
  %v2702 = vadd.f32 %v2664, 1e-12
  %v2703 = vadd.f32 %v2665, 1e-12
  %v2704 = vadd.f32 %v2666, 1e-12
  %v2705 = vadd.f32 %v2667, 1e-12
  %v2706 = vadd.f32 %v2668, 1e-12
  %v2707 = vadd.f32 %v2669, 1e-12
  %v2708 = vadd.f32 %v2670, 1e-12
  %v2709 = vadd.f32 %v2671, 1e-12
  %v2710 = vadd.f32 %v2672, 1e-12
  %v2711 = vadd.f32 %v2673, 1e-12
  %v2712 = vadd.f32 %v2674, 1e-12
  %v2713 = vadd.f32 %v2675, 1e-12
  %v2714 = vadd.f32 %v2676, 1e-12
  %v2715 = vrsqrt.pop %v2696
  %v2716 = vmul.f32 %v2715, %v2696
  %v2717 = vmul.f32 %v2716, %v2715
  %v2718 = vmul.f32 0.5, %v2717
  %v2719 = vsub.f32 1.5, %v2718
  %v2720 = vmul.f32 %v2715, %v2719
  %vm2721 = vweird.f32 %v2696
  %vm2722 = vweird.f32 %v2715
  %vm2723 = vmor %vm2721, %vm2722
  %v2724 = vsel %vm2723, %v2715, %v2720
  %v2725 = vrsqrt.pop %v2697
  %v2726 = vmul.f32 %v2725, %v2697
  %v2727 = vmul.f32 %v2726, %v2725
  %v2728 = vmul.f32 0.5, %v2727
  %v2729 = vsub.f32 1.5, %v2728
  %v2730 = vmul.f32 %v2725, %v2729
  %vm2731 = vweird.f32 %v2697
  %vm2732 = vweird.f32 %v2725
  %vm2733 = vmor %vm2731, %vm2732
  %v2734 = vsel %vm2733, %v2725, %v2730
  %v2735 = vrsqrt.pop %v2698
  %v2736 = vmul.f32 %v2735, %v2698
  %v2737 = vmul.f32 %v2736, %v2735
  %v2738 = vmul.f32 0.5, %v2737
  %v2739 = vsub.f32 1.5, %v2738
  %v2740 = vmul.f32 %v2735, %v2739
  %vm2741 = vweird.f32 %v2698
  %vm2742 = vweird.f32 %v2735
  %vm2743 = vmor %vm2741, %vm2742
  %v2744 = vsel %vm2743, %v2735, %v2740
  %v2745 = vrsqrt.pop %v2699
  %v2746 = vmul.f32 %v2745, %v2699
  %v2747 = vmul.f32 %v2746, %v2745
  %v2748 = vmul.f32 0.5, %v2747
  %v2749 = vsub.f32 1.5, %v2748
  %v2750 = vmul.f32 %v2745, %v2749
  %vm2751 = vweird.f32 %v2699
  %vm2752 = vweird.f32 %v2745
  %vm2753 = vmor %vm2751, %vm2752
  %v2754 = vsel %vm2753, %v2745, %v2750
  %v2755 = vrsqrt.pop %v2700
  %v2756 = vmul.f32 %v2755, %v2700
  %v2757 = vmul.f32 %v2756, %v2755
  %v2758 = vmul.f32 0.5, %v2757
  %v2759 = vsub.f32 1.5, %v2758
  %v2760 = vmul.f32 %v2755, %v2759
  %vm2761 = vweird.f32 %v2700
  %vm2762 = vweird.f32 %v2755
  %vm2763 = vmor %vm2761, %vm2762
  %v2764 = vsel %vm2763, %v2755, %v2760
  %v2765 = vrsqrt.pop %v2701
  %v2766 = vmul.f32 %v2765, %v2701
  %v2767 = vmul.f32 %v2766, %v2765
  %v2768 = vmul.f32 0.5, %v2767
  %v2769 = vsub.f32 1.5, %v2768
  %v2770 = vmul.f32 %v2765, %v2769
  %vm2771 = vweird.f32 %v2701
  %vm2772 = vweird.f32 %v2765
  %vm2773 = vmor %vm2771, %vm2772
  %v2774 = vsel %vm2773, %v2765, %v2770
  %v2775 = vrsqrt.pop %v2702
  %v2776 = vmul.f32 %v2775, %v2702
  %v2777 = vmul.f32 %v2776, %v2775
  %v2778 = vmul.f32 0.5, %v2777
  %v2779 = vsub.f32 1.5, %v2778
  %v2780 = vmul.f32 %v2775, %v2779
  %vm2781 = vweird.f32 %v2702
  %vm2782 = vweird.f32 %v2775
  %vm2783 = vmor %vm2781, %vm2782
  %v2784 = vsel %vm2783, %v2775, %v2780
  %v2785 = vrsqrt.pop %v2703
  %v2786 = vmul.f32 %v2785, %v2703
  %v2787 = vmul.f32 %v2786, %v2785
  %v2788 = vmul.f32 0.5, %v2787
  %v2789 = vsub.f32 1.5, %v2788
  %v2790 = vmul.f32 %v2785, %v2789
  %vm2791 = vweird.f32 %v2703
  %vm2792 = vweird.f32 %v2785
  %vm2793 = vmor %vm2791, %vm2792
  %v2794 = vsel %vm2793, %v2785, %v2790
  %v2795 = vrsqrt.pop %v2704
  %v2796 = vmul.f32 %v2795, %v2704
  %v2797 = vmul.f32 %v2796, %v2795
  %v2798 = vmul.f32 0.5, %v2797
  %v2799 = vsub.f32 1.5, %v2798
  %v2800 = vmul.f32 %v2795, %v2799
  %vm2801 = vweird.f32 %v2704
  %vm2802 = vweird.f32 %v2795
  %vm2803 = vmor %vm2801, %vm2802
  %v2804 = vsel %vm2803, %v2795, %v2800
  %v2805 = vrsqrt.pop %v2705
  %v2806 = vmul.f32 %v2805, %v2705
  %v2807 = vmul.f32 %v2806, %v2805
  %v2808 = vmul.f32 0.5, %v2807
  %v2809 = vsub.f32 1.5, %v2808
  %v2810 = vmul.f32 %v2805, %v2809
  %vm2811 = vweird.f32 %v2705
  %vm2812 = vweird.f32 %v2805
  %vm2813 = vmor %vm2811, %vm2812
  %v2814 = vsel %vm2813, %v2805, %v2810
  %v2815 = vrsqrt.pop %v2706
  %v2816 = vmul.f32 %v2815, %v2706
  %v2817 = vmul.f32 %v2816, %v2815
  %v2818 = vmul.f32 0.5, %v2817
  %v2819 = vsub.f32 1.5, %v2818
  %v2820 = vmul.f32 %v2815, %v2819
  %vm2821 = vweird.f32 %v2706
  %vm2822 = vweird.f32 %v2815
  %vm2823 = vmor %vm2821, %vm2822
  %v2824 = vsel %vm2823, %v2815, %v2820
  %v2825 = vrsqrt.pop %v2707
  %v2826 = vmul.f32 %v2825, %v2707
  %v2827 = vmul.f32 %v2826, %v2825
  %v2828 = vmul.f32 0.5, %v2827
  %v2829 = vsub.f32 1.5, %v2828
  %v2830 = vmul.f32 %v2825, %v2829
  %vm2831 = vweird.f32 %v2707
  %vm2832 = vweird.f32 %v2825
  %vm2833 = vmor %vm2831, %vm2832
  %v2834 = vsel %vm2833, %v2825, %v2830
  %v2835 = vrsqrt.pop %v2708
  %v2836 = vmul.f32 %v2835, %v2708
  %v2837 = vmul.f32 %v2836, %v2835
  %v2838 = vmul.f32 0.5, %v2837
  %v2839 = vsub.f32 1.5, %v2838
  %v2840 = vmul.f32 %v2835, %v2839
  %vm2841 = vweird.f32 %v2708
  %vm2842 = vweird.f32 %v2835
  %vm2843 = vmor %vm2841, %vm2842
  %v2844 = vsel %vm2843, %v2835, %v2840
  %v2845 = vrsqrt.pop %v2709
  %v2846 = vmul.f32 %v2845, %v2709
  %v2847 = vmul.f32 %v2846, %v2845
  %v2848 = vmul.f32 0.5, %v2847
  %v2849 = vsub.f32 1.5, %v2848
  %v2850 = vmul.f32 %v2845, %v2849
  %vm2851 = vweird.f32 %v2709
  %vm2852 = vweird.f32 %v2845
  %vm2853 = vmor %vm2851, %vm2852
  %v2854 = vsel %vm2853, %v2845, %v2850
  %v2855 = vrsqrt.pop %v2710
  %v2856 = vmul.f32 %v2855, %v2710
  %v2857 = vmul.f32 %v2856, %v2855
  %v2858 = vmul.f32 0.5, %v2857
  %v2859 = vsub.f32 1.5, %v2858
  %v2860 = vmul.f32 %v2855, %v2859
  %vm2861 = vweird.f32 %v2710
  %vm2862 = vweird.f32 %v2855
  %vm2863 = vmor %vm2861, %vm2862
  %v2864 = vsel %vm2863, %v2855, %v2860
  %v2865 = vrsqrt.pop %v2711
  %v2866 = vmul.f32 %v2865, %v2711
  %v2867 = vmul.f32 %v2866, %v2865
  %v2868 = vmul.f32 0.5, %v2867
  %v2869 = vsub.f32 1.5, %v2868
  %v2870 = vmul.f32 %v2865, %v2869
  %vm2871 = vweird.f32 %v2711
  %vm2872 = vweird.f32 %v2865
  %vm2873 = vmor %vm2871, %vm2872
  %v2874 = vsel %vm2873, %v2865, %v2870
  %v2875 = vrsqrt.pop %v2712
  %v2876 = vmul.f32 %v2875, %v2712
  %v2877 = vmul.f32 %v2876, %v2875
  %v2878 = vmul.f32 0.5, %v2877
  %v2879 = vsub.f32 1.5, %v2878
  %v2880 = vmul.f32 %v2875, %v2879
  %vm2881 = vweird.f32 %v2712
  %vm2882 = vweird.f32 %v2875
  %vm2883 = vmor %vm2881, %vm2882
  %v2884 = vsel %vm2883, %v2875, %v2880
  %v2885 = vrsqrt.pop %v2713
  %v2886 = vmul.f32 %v2885, %v2713
  %v2887 = vmul.f32 %v2886, %v2885
  %v2888 = vmul.f32 0.5, %v2887
  %v2889 = vsub.f32 1.5, %v2888
  %v2890 = vmul.f32 %v2885, %v2889
  %vm2891 = vweird.f32 %v2713
  %vm2892 = vweird.f32 %v2885
  %vm2893 = vmor %vm2891, %vm2892
  %v2894 = vsel %vm2893, %v2885, %v2890
  %v2895 = vrsqrt.pop %v2714
  %v2896 = vmul.f32 %v2895, %v2714
  %v2897 = vmul.f32 %v2896, %v2895
  %v2898 = vmul.f32 0.5, %v2897
  %v2899 = vsub.f32 1.5, %v2898
  %v2900 = vmul.f32 %v2895, %v2899
  %vm2901 = vweird.f32 %v2714
  %vm2902 = vweird.f32 %v2895
  %vm2903 = vmor %vm2901, %vm2902
  %v2904 = vsel %vm2903, %v2895, %v2900
  %v2905 = vmul.f32 %v2677, %v2724
  %v2906 = vmul.f32 %v2678, %v2734
  %v2907 = vmul.f32 %v2679, %v2744
  %v2908 = vmul.f32 %v2680, %v2754
  %v2909 = vmul.f32 %v2681, %v2764
  %v2910 = vmul.f32 %v2682, %v2774
  %v2911 = vmul.f32 %v2683, %v2784
  %v2912 = vmul.f32 %v2684, %v2794
  %v2913 = vmul.f32 %v2685, %v2804
  %v2914 = vmul.f32 %v2686, %v2814
  %v2915 = vmul.f32 %v2687, %v2824
  %v2916 = vmul.f32 %v2688, %v2834
  %v2917 = vmul.f32 %v2689, %v2844
  %v2918 = vmul.f32 %v2690, %v2854
  %v2919 = vmul.f32 %v2691, %v2864
  %v2920 = vmul.f32 %v2692, %v2874
  %v2921 = vmul.f32 %v2693, %v2884
  %v2922 = vmul.f32 %v2694, %v2894
  %v2923 = vmul.f32 %v2695, %v2904
  %v2924 = vperm.slane %v31, 0
  %v2925 = vmul.f32 %v2905, %v2924
  %v2926 = vmul.f32 %v2906, %v2924
  %v2927 = vmul.f32 %v2907, %v2924
  %v2928 = vmul.f32 %v2908, %v2924
  %v2929 = vmul.f32 %v2909, %v2924
  %v2930 = vmul.f32 %v2910, %v2924
  %v2931 = vmul.f32 %v2911, %v2924
  %v2932 = vmul.f32 %v2912, %v2924
  %v2933 = vmul.f32 %v2913, %v2924
  %v2934 = vmul.f32 %v2914, %v2924
  %v2935 = vmul.f32 %v2915, %v2924
  %v2936 = vmul.f32 %v2916, %v2924
  %v2937 = vmul.f32 %v2917, %v2924
  %v2938 = vmul.f32 %v2918, %v2924
  %v2939 = vmul.f32 %v2919, %v2924
  %v2940 = vmul.f32 %v2920, %v2924
  %v2941 = vmul.f32 %v2921, %v2924
  %v2942 = vmul.f32 %v2922, %v2924
  %v2943 = vmul.f32 %v2923, %v2924
  %v2944 = vperm.slane %v31, 1
  %v2945 = vadd.f32 %v2925, %v2944
  %v2946 = vadd.f32 %v2926, %v2944
  %v2947 = vadd.f32 %v2927, %v2944
  %v2948 = vadd.f32 %v2928, %v2944
  %v2949 = vadd.f32 %v2929, %v2944
  %v2950 = vadd.f32 %v2930, %v2944
  %v2951 = vadd.f32 %v2931, %v2944
  %v2952 = vadd.f32 %v2932, %v2944
  %v2953 = vadd.f32 %v2933, %v2944
  %v2954 = vadd.f32 %v2934, %v2944
  %v2955 = vadd.f32 %v2935, %v2944
  %v2956 = vadd.f32 %v2936, %v2944
  %v2957 = vadd.f32 %v2937, %v2944
  %v2958 = vadd.f32 %v2938, %v2944
  %v2959 = vadd.f32 %v2939, %v2944
  %v2960 = vadd.f32 %v2940, %v2944
  %v2961 = vadd.f32 %v2941, %v2944
  %v2962 = vadd.f32 %v2942, %v2944
  %v2963 = vadd.f32 %v2943, %v2944
  %2964 = vst.msk [vmem:[%s8] sm:$0xff] %vm750, %v2945
  %2965 = vst.msk [vmem:[%s8 + $0x8] sm:$0xff] %vm750, %v2946
  %2966 = vst.msk [vmem:[%s8 + $0x10] sm:$0xff] %vm750, %v2947
  %2967 = vst.msk [vmem:[%s8 + $0x18] sm:$0xff] %vm750, %v2948
  %2968 = vst.msk [vmem:[%s8 + $0x20] sm:$0xff] %vm750, %v2949
  %2969 = vst.msk [vmem:[%s8 + $0x28] sm:$0xff] %vm750, %v2950
  %2970 = vst.msk [vmem:[%s8 + $0x30] sm:$0xff] %vm750, %v2951
  %2971 = vst.msk [vmem:[%s8 + $0x38] sm:$0xff] %vm750, %v2952
  %2972 = vst.msk [vmem:[%s8 + $0x40] sm:$0xff] %vm750, %v2953
  %2973 = vst.msk [vmem:[%s8 + $0x48] sm:$0xff] %vm750, %v2954
  %2974 = vst.msk [vmem:[%s8 + $0x50] sm:$0xff] %vm750, %v2955
  %2975 = vst.msk [vmem:[%s8 + $0x58] sm:$0xff] %vm750, %v2956
  %2976 = vst.msk [vmem:[%s8 + $0x60] sm:$0xff] %vm750, %v2957
  %2977 = vst.msk [vmem:[%s8 + $0x68] sm:$0xff] %vm750, %v2958
  %2978 = vst.msk [vmem:[%s8 + $0x70] sm:$0xff] %vm750, %v2959
  %2979 = vst.msk [vmem:[%s8 + $0x78] sm:$0xff] %vm750, %v2960
  %2980 = vst.msk [vmem:[%s8 + $0x80] sm:$0xff] %vm750, %v2961
  %2981 = vst.msk [vmem:[%s8 + $0x88] sm:$0xff] %vm750, %v2962
  %2982 = vst.msk [vmem:[%s8 + $0x90] sm:$0x3] %vm805, %v2963
  // Predicated region
  $region34: #{tpu_custom_call.1} parent=0 // pred_check
    _
  $region35: #{tpu_custom_call.1} parent=0 // pred_check_branch
    %2984 = sbr.rel (0) target = $region37
  $region36: #{tpu_custom_call.1} parent=0 // pred_region
    _
  $region37: #{tpu_custom_call.1} parent=0 // pred_fallthru
    _
  // Predicated region
  $region38: #{tpu_custom_call.1} parent=0 // pred_check
    _
  $region39: #{tpu_custom_call.1} parent=0 // pred_check_branch
    %2986 = sbr.rel (0) target = $region41
  $region40: #{tpu_custom_call.1} parent=0 // pred_region
    _
  $region41: #{tpu_custom_call.1} parent=0 // pred_fallthru
    _

</llo_original>
